<compile_context>
chip_gen: v7x
topology: tpu7x:2x2x1
jax: 0.10.0
libtpu: 0.0.40
codegen_flags: <defaults>
</compile_context>

<pallas_src>
import jax
import jax.numpy as jnp
from jax import lax
from jax.experimental import pallas as pl
from jax.experimental.pallas import tpu as pltpu

# ---- model dims (small, synthetic) ----
B = 2        # batch
S = 8        # sequence length
D = 32       # hidden
F = 64       # FFN inner
V = 64       # vocab size
BS = B * S   # flattened tokens (matmul M dim)
NEG = 1e9          # padding / causal mask fill
BLOCK_NEG = 2e9    # cross-batch (block-diagonal) mask fill
SEG = 128    # lane-aligned weight-slab segment width
BF = jnp.bfloat16


# --------------------------- fused generator kernel -------------------------
def fused_generator_kernel(xe_ref, xd_ref, bias_pad_ref, bias_causal_ref,
                           wa_ref, wb_ref, o_ref):
    # xe_ref/xd_ref:   (B*S, D) bf16 encoder/decoder input embeddings
    # bias_pad_ref:    (B*S, B*S) f32 additive bias: block-diag + enc padding
    # bias_causal_ref: (B*S, B*S) f32 additive bias: block-diag + causal
    # wa_ref:          (D, 15*SEG) bf16 packed weight slab
    # wb_ref:          (F, 2*SEG)  bf16 packed weight slab
    # o_ref:           (B*S, SEG) f32 lane-dense logits (cols >= V are padding)
    xe = xe_ref[...].astype(jnp.float32)            # (16, 32)
    xd = xd_ref[...].astype(jnp.float32)            # (16, 32)
    bias_pad = bias_pad_ref[...]                    # (16, 16)
    bias_causal = bias_causal_ref[...]              # (16, 16)

    def wa(seg, width=D):                           # 128-lane-aligned slices
        off = seg * SEG
        return wa_ref[:, off:off + width]

    def wb(seg, width=D):
        off = seg * SEG
        return wb_ref[:, off:off + width]

    def mm(x, w):
        # bf16 x bf16 MXU matmul, f32 accumulation.
        return jnp.dot(x.astype(BF), w.astype(BF),
                       preferred_element_type=jnp.float32)

    def attend(q, k, v, bias):
        # q/k/v: (B*S, D) f32; bias: (B*S, B*S) f32 (block-diag already fused)
        s = lax.dot_general(q.astype(BF), k.astype(BF),
                            (((1,), (1,)), ((), ())),
                            preferred_element_type=jnp.float32)   # (16, 16)
        s = s + bias
        s = s - jnp.max(s, axis=-1, keepdims=True)
        e = jnp.exp(s)
        p = e * pl.reciprocal(jnp.sum(e, axis=-1, keepdims=True), approx=True)
        return mm(p, v)                                            # (16, 32)

    # ---------------- encoder layer ----------------
    q = mm(xe, wa(0))
    k = mm(xe, wa(1))
    v = mm(xe, wa(2))
    attn = attend(q, k, v, bias_pad)
    h = xe + mm(attn, wa(3))
    ff = mm(jnp.maximum(mm(h, wa(4, F)), 0.0), wb(0))
    enc = h + ff                                                   # (16, 32)

    # ---------------- decoder layer ----------------
    # causal self-attention
    qs = mm(xd, wa(5))
    ks = mm(xd, wa(6))
    vs = mm(xd, wa(7))
    sattn = attend(qs, ks, vs, bias_causal)
    h1 = xd + mm(sattn, wa(8))

    # cross-attention to encoder output
    qc = mm(h1, wa(9))
    kc = mm(enc, wa(10))
    vc = mm(enc, wa(11))
    cattn = attend(qc, kc, vc, bias_pad)
    h2 = h1 + mm(cattn, wa(12))

    # feed-forward
    ff_d = mm(jnp.maximum(mm(h2, wa(13, F)), 0.0), wb(1))
    h3 = h2 + ff_d

    # LM head — padded-to-128 segment => unmasked, lane-dense store
    o_ref[...] = mm(h3, wa(14, SEG))


# --------------------------- weight packing (once, at init) -----------------
def _pad_seg(w):
    return jnp.pad(w, ((0, 0), (0, SEG - w.shape[1])))


def pack_params(params):
    """Pack all weights into two lane-aligned bf16 VMEM slabs (done ONCE).

    Slab A (D rows), one 128-lane segment per weight:
      0: wq_e*scale  1: wk_e  2: wv_e  3: wo_e  4: w1_e
      5: wq_s*scale  6: wk_s  7: wv_s  8: wo_s
      9: wq_c*scale 10: wk_c 11: wv_c 12: wo_c 13: w1_d
     14: w_lm (zero-padded to 128 lanes)
    Slab B (F rows): 0: w2_e   1: w2_d
    """
    scale = 1.0 / (float(D) ** 0.5)           # folded into the Q projections
    segs_a = [
        params["e_wq"] * scale, params["e_wk"], params["e_wv"], params["e_wo"],
        params["e_w1"],
        params["d_wq_s"] * scale, params["d_wk_s"], params["d_wv_s"],
        params["d_wo_s"],
        params["d_wq_c"] * scale, params["d_wk_c"], params["d_wv_c"],
        params["d_wo_c"],
        params["d_w1"],
        params["w_lm"],
    ]
    segs_b = [params["e_w2"], params["d_w2"]]
    wa = jnp.concatenate([_pad_seg(w) for w in segs_a], axis=1).astype(BF)
    wb = jnp.concatenate([_pad_seg(w) for w in segs_b], axis=1).astype(BF)
    return {"tok_emb": params["tok_emb"], "pos_emb": params["pos_emb"],
            "wa": wa, "wb": wb}


# --------------------------- wrapper (== forward) ---------------------------
@jax.jit
def ms2mol_wrapper_generator_forward(packed, ms_input, intensity,
                                     attention_mask=None):
    """Mirrors MS2MolWrapperGenerator.forward:
       generator(encoder_input_ids=ms_input, intensity=intensity,
                 decoder_input_ids=ms_input, encoder_attention_mask=mask)

    `packed` is the output of pack_params() — weight slabs are pre-packed at
    init time, NOT rebuilt per call."""
    if attention_mask is None:
        attention_mask = jnp.ones(ms_input.shape, dtype=jnp.float32)

    # Glue: embedding gather + intensity scaling + positional embedding.
    emb = jnp.take(packed["tok_emb"], ms_input, axis=0)            # (B, S, D)
    pos = packed["pos_emb"][None, :, :]                            # (1, S, D)
    x_enc = (emb * intensity[..., None] + pos).reshape(BS, D).astype(BF)
    x_dec = (emb + pos).reshape(BS, D).astype(BF)

    # Precomputed additive attention biases for the flattened (B*S, B*S)
    # score matrices: block-diagonal batch mask fused with encoder padding
    # (bias_pad) or with the causal mask (bias_causal).
    bidx = jnp.arange(BS, dtype=jnp.int32) // S
    pidx = jnp.arange(BS, dtype=jnp.int32) % S
    same_batch = bidx[:, None] == bidx[None, :]
    key_keep = attention_mask.astype(jnp.float32).reshape(BS)
    bias_pad = jnp.where(
        same_batch,
        jnp.broadcast_to((key_keep[None, :] - 1.0) * NEG, (BS, BS)),
        -BLOCK_NEG).astype(jnp.float32)
    bias_causal = jnp.where(same_batch & (pidx[None, :] <= pidx[:, None]),
                            0.0, -NEG).astype(jnp.float32)

    cost = pl.CostEstimate(flops=884_736, transcendentals=816,
                           bytes_accessed=167_936)
    vmem = lambda: pl.BlockSpec(memory_space=pltpu.MemorySpace.VMEM)
    out = pl.pallas_call(
        fused_generator_kernel,
        out_shape=jax.ShapeDtypeStruct((BS, SEG), jnp.float32),
        in_specs=[vmem() for _ in range(6)],
        out_specs=vmem(),
        cost_estimate=cost,
    )(x_enc, x_dec, bias_pad, bias_causal, packed["wa"], packed["wb"])

    return out[:, :V].reshape(B, S, V)


# --------------------------- pure-JAX reference ------------------------------
def forward_reference(params, ms_input, intensity, attention_mask):
    mask3 = attention_mask.astype(jnp.float32).reshape(B, 1, S)
    emb = jnp.take(params["tok_emb"], ms_input, axis=0)
    pos = params["pos_emb"][None]
    x_enc = emb * intensity[..., None] + pos
    x_dec = emb + pos
    scale = 1.0 / (float(D) ** 0.5)

    def softmax(s):
        s = s - jnp.max(s, -1, keepdims=True)
        e = jnp.exp(s)
        return e / jnp.sum(e, -1, keepdims=True)

    # encoder
    q, k, v = (x_enc @ params["e_wq"], x_enc @ params["e_wk"],
               x_enc @ params["e_wv"])
    s = jnp.einsum('bqd,bkd->bqk', q, k) * scale + (mask3 - 1.0) * NEG
    h = x_enc + jnp.einsum('bqk,bkd->bqd', softmax(s), v) @ params["e_wo"]
    enc = h + jnp.maximum(h @ params["e_w1"], 0.0) @ params["e_w2"]

    # decoder self-attention (causal)
    qs, ks, vs = (x_dec @ params["d_wq_s"], x_dec @ params["d_wk_s"],
                  x_dec @ params["d_wv_s"])
    ss = jnp.einsum('bqd,bkd->bqk', qs, ks) * scale
    row = lax.broadcasted_iota(jnp.int32, (S, S), 0)
    col = lax.broadcasted_iota(jnp.int32, (S, S), 1)
    ss = jnp.where(col[None] <= row[None], ss, -NEG)
    h1 = x_dec + jnp.einsum('bqk,bkd->bqd', softmax(ss), vs) @ params["d_wo_s"]

    # cross-attention
    qc, kc, vc = (h1 @ params["d_wq_c"], enc @ params["d_wk_c"],
                  enc @ params["d_wv_c"])
    sc = jnp.einsum('bqd,bkd->bqk', qc, kc) * scale + (mask3 - 1.0) * NEG
    h2 = h1 + jnp.einsum('bqk,bkd->bqd', softmax(sc), vc) @ params["d_wo_c"]
    h3 = h2 + jnp.maximum(h2 @ params["d_w1"], 0.0) @ params["d_w2"]
    return h3 @ params["w_lm"]


def init_params(key):
    names_shapes = [
        ("tok_emb", (V, D)), ("pos_emb", (S, D)),
        ("e_wq", (D, D)), ("e_wk", (D, D)), ("e_wv", (D, D)), ("e_wo", (D, D)),
        ("e_w1", (D, F)), ("e_w2", (F, D)),
        ("d_wq_s", (D, D)), ("d_wk_s", (D, D)), ("d_wv_s", (D, D)), ("d_wo_s", (D, D)),
        ("d_wq_c", (D, D)), ("d_wk_c", (D, D)), ("d_wv_c", (D, D)), ("d_wo_c", (D, D)),
        ("d_w1", (D, F)), ("d_w2", (F, D)),
        ("w_lm", (D, V)),
    ]
    keys = jax.random.split(key, len(names_shapes))
    return {name: 0.02 * jax.random.normal(k, shape, dtype=jnp.float32)
            for (name, shape), k in zip(names_shapes, keys)}


if __name__ == "__main__":
    root = jax.random.PRNGKey(0)
    k_par, k_ids, k_int = jax.random.split(root, 3)

    params = init_params(k_par)
    packed = pack_params(params)          # packed ONCE, outside the hot path
    packed = jax.tree_util.tree_map(jax.block_until_ready, packed)

    ms_input = jax.random.randint(k_ids, (B, S), 0, V, dtype=jnp.int32)
    intensity = jax.random.uniform(k_int, (B, S), dtype=jnp.float32)
    attention_mask = jnp.ones((B, S), dtype=jnp.float32).at[1, S - 1].set(0.0)

    logits = ms2mol_wrapper_generator_forward(packed, ms_input, intensity,
                                              attention_mask)
    jax.block_until_ready(logits)

    assert logits.shape == (B, S, V) and logits.dtype == jnp.float32
    assert bool(jnp.all(jnp.isfinite(logits)))

    ref = forward_reference(params, ms_input, intensity, attention_mask)
    assert bool(jnp.allclose(logits, ref, rtol=2e-2, atol=2e-3)), \
        "Pallas kernel output mismatches pure-JAX reference"

    print("KERNEL_OK")
</pallas_src>

<mosaic_0001>
module attributes {stable_mosaic.version = 11 : i64} {
  func.func @fused_generator_kernel(%arg0: memref<16x32xbf16, #tpu.memory_space<vmem>>, %arg1: memref<16x32xbf16, #tpu.memory_space<vmem>>, %arg2: memref<16x16xf32, #tpu.memory_space<vmem>>, %arg3: memref<16x16xf32, #tpu.memory_space<vmem>>, %arg4: memref<32x1920xbf16, #tpu.memory_space<vmem>>, %arg5: memref<64x256xbf16, #tpu.memory_space<vmem>>, %arg6: memref<16x128xf32, #tpu.memory_space<vmem>>) attributes {dimension_semantics = [], scalar_prefetch = 0 : i64, scratch_operands = 0 : i64, tpu.core_type = #tpu.core_type<tc>} {
    %c0 = arith.constant 0 : index
    %c0_0 = arith.constant 0 : index
    %0 = vector.load %arg0[%c0, %c0_0] : memref<16x32xbf16, #tpu.memory_space<vmem>>, vector<16x32xbf16>
    %1 = arith.extf %0 : vector<16x32xbf16> to vector<16x32xf32>
    %c0_1 = arith.constant 0 : index
    %c0_2 = arith.constant 0 : index
    %2 = vector.load %arg1[%c0_1, %c0_2] : memref<16x32xbf16, #tpu.memory_space<vmem>>, vector<16x32xbf16>
    %3 = arith.extf %2 : vector<16x32xbf16> to vector<16x32xf32>
    %c0_3 = arith.constant 0 : index
    %c0_4 = arith.constant 0 : index
    %4 = vector.load %arg2[%c0_3, %c0_4] : memref<16x16xf32, #tpu.memory_space<vmem>>, vector<16x16xf32>
    %c0_5 = arith.constant 0 : index
    %c0_6 = arith.constant 0 : index
    %5 = vector.load %arg3[%c0_5, %c0_6] : memref<16x16xf32, #tpu.memory_space<vmem>>, vector<16x16xf32>
    %c0_7 = arith.constant 0 : index
    %c0_8 = arith.constant 0 : index
    %6 = vector.load %arg4[%c0_7, %c0_8] : memref<32x1920xbf16, #tpu.memory_space<vmem>>, vector<32x32xbf16>
    %7 = arith.truncf %1 : vector<16x32xf32> to vector<16x32xbf16>
    %cst = arith.constant dense<0.000000e+00> : vector<16x32xf32>
    %8 = tpu.matmul %7, %6, %cst {dimension_numbers = #tpu.dot_dimension_numbers<[1], [0], [0], [1], [0, 0, 1, 1], [], []>} : vector<16x32xbf16>, vector<32x32xbf16>, vector<16x32xf32> -> vector<16x32xf32>
    %c0_9 = arith.constant 0 : index
    %c128 = arith.constant 128 : index
    %9 = vector.load %arg4[%c0_9, %c128] : memref<32x1920xbf16, #tpu.memory_space<vmem>>, vector<32x32xbf16>
    %10 = arith.truncf %1 : vector<16x32xf32> to vector<16x32xbf16>
    %cst_10 = arith.constant dense<0.000000e+00> : vector<16x32xf32>
    %11 = tpu.matmul %10, %9, %cst_10 {dimension_numbers = #tpu.dot_dimension_numbers<[1], [0], [0], [1], [0, 0, 1, 1], [], []>} : vector<16x32xbf16>, vector<32x32xbf16>, vector<16x32xf32> -> vector<16x32xf32>
    %c0_11 = arith.constant 0 : index
    %c256 = arith.constant 256 : index
    %12 = vector.load %arg4[%c0_11, %c256] : memref<32x1920xbf16, #tpu.memory_space<vmem>>, vector<32x32xbf16>
    %13 = arith.truncf %1 : vector<16x32xf32> to vector<16x32xbf16>
    %cst_12 = arith.constant dense<0.000000e+00> : vector<16x32xf32>
    %14 = tpu.matmul %13, %12, %cst_12 {dimension_numbers = #tpu.dot_dimension_numbers<[1], [0], [0], [1], [0, 0, 1, 1], [], []>} : vector<16x32xbf16>, vector<32x32xbf16>, vector<16x32xf32> -> vector<16x32xf32>
    %15 = arith.truncf %8 : vector<16x32xf32> to vector<16x32xbf16>
    %16 = arith.truncf %11 : vector<16x32xf32> to vector<16x32xbf16>
    %cst_13 = arith.constant dense<0.000000e+00> : vector<16x16xf32>
    %17 = tpu.matmul %15, %16, %cst_13 {dimension_numbers = #tpu.dot_dimension_numbers<[1], [1], [0], [0], [0, 0, 1, 0], [], []>} : vector<16x32xbf16>, vector<16x32xbf16>, vector<16x16xf32> -> vector<16x16xf32>
    %18 = arith.addf %17, %4 : vector<16x16xf32>
    %cst_14 = arith.constant dense<0xFF800000> : vector<16xf32>
    %19 = vector.multi_reduction <maximumf>, %18, %cst_14 [1] : vector<16x16xf32> to vector<16xf32>
    %20 = vector.shape_cast %19 : vector<16xf32> to vector<16x1xf32>
    %21 = vector.broadcast %20 : vector<16x1xf32> to vector<16x16xf32>
    %22 = arith.subf %18, %21 : vector<16x16xf32>
    %23 = math.exp %22 : vector<16x16xf32>
    %cst_15 = arith.constant dense<0.000000e+00> : vector<16xf32>
    %24 = vector.multi_reduction <add>, %23, %cst_15 [1] : vector<16x16xf32> to vector<16xf32>
    %25 = vector.shape_cast %24 : vector<16xf32> to vector<16x1xf32>
    %26 = tpu.reciprocal %25 {approx = true} : vector<16x1xf32> -> vector<16x1xf32>
    %27 = vector.broadcast %26 : vector<16x1xf32> to vector<16x16xf32>
    %28 = arith.mulf %23, %27 : vector<16x16xf32>
    %29 = arith.truncf %28 : vector<16x16xf32> to vector<16x16xbf16>
    %30 = arith.truncf %14 : vector<16x32xf32> to vector<16x32xbf16>
    %cst_16 = arith.constant dense<0.000000e+00> : vector<16x32xf32>
    %31 = tpu.matmul %29, %30, %cst_16 {dimension_numbers = #tpu.dot_dimension_numbers<[1], [0], [0], [1], [0, 0, 1, 1], [], []>} : vector<16x16xbf16>, vector<16x32xbf16>, vector<16x32xf32> -> vector<16x32xf32>
    %c0_17 = arith.constant 0 : index
    %c384 = arith.constant 384 : index
    %32 = vector.load %arg4[%c0_17, %c384] : memref<32x1920xbf16, #tpu.memory_space<vmem>>, vector<32x32xbf16>
    %33 = arith.truncf %31 : vector<16x32xf32> to vector<16x32xbf16>
    %cst_18 = arith.constant dense<0.000000e+00> : vector<16x32xf32>
    %34 = tpu.matmul %33, %32, %cst_18 {dimension_numbers = #tpu.dot_dimension_numbers<[1], [0], [0], [1], [0, 0, 1, 1], [], []>} : vector<16x32xbf16>, vector<32x32xbf16>, vector<16x32xf32> -> vector<16x32xf32>
    %35 = arith.addf %1, %34 : vector<16x32xf32>
    %c0_19 = arith.constant 0 : index
    %c512 = arith.constant 512 : index
    %36 = vector.load %arg4[%c0_19, %c512] : memref<32x1920xbf16, #tpu.memory_space<vmem>>, vector<32x64xbf16>
    %37 = arith.truncf %35 : vector<16x32xf32> to vector<16x32xbf16>
    %cst_20 = arith.constant dense<0.000000e+00> : vector<16x64xf32>
    %38 = tpu.matmul %37, %36, %cst_20 {dimension_numbers = #tpu.dot_dimension_numbers<[1], [0], [0], [1], [0, 0, 1, 1], [], []>} : vector<16x32xbf16>, vector<32x64xbf16>, vector<16x64xf32> -> vector<16x64xf32>
    %cst_21 = arith.constant 0.000000e+00 : f32
    %39 = vector.broadcast %cst_21 : f32 to vector<16x64xf32>
    %40 = arith.maximumf %38, %39 : vector<16x64xf32>
    %c0_22 = arith.constant 0 : index
    %c0_23 = arith.constant 0 : index
    %41 = vector.load %arg5[%c0_22, %c0_23] : memref<64x256xbf16, #tpu.memory_space<vmem>>, vector<64x32xbf16>
    %42 = arith.truncf %40 : vector<16x64xf32> to vector<16x64xbf16>
    %cst_24 = arith.constant dense<0.000000e+00> : vector<16x32xf32>
    %43 = tpu.matmul %42, %41, %cst_24 {dimension_numbers = #tpu.dot_dimension_numbers<[1], [0], [0], [1], [0, 0, 1, 1], [], []>} : vector<16x64xbf16>, vector<64x32xbf16>, vector<16x32xf32> -> vector<16x32xf32>
    %44 = arith.addf %35, %43 : vector<16x32xf32>
    %c0_25 = arith.constant 0 : index
    %c640 = arith.constant 640 : index
    %45 = vector.load %arg4[%c0_25, %c640] : memref<32x1920xbf16, #tpu.memory_space<vmem>>, vector<32x32xbf16>
    %46 = arith.truncf %3 : vector<16x32xf32> to vector<16x32xbf16>
    %cst_26 = arith.constant dense<0.000000e+00> : vector<16x32xf32>
    %47 = tpu.matmul %46, %45, %cst_26 {dimension_numbers = #tpu.dot_dimension_numbers<[1], [0], [0], [1], [0, 0, 1, 1], [], []>} : vector<16x32xbf16>, vector<32x32xbf16>, vector<16x32xf32> -> vector<16x32xf32>
    %c0_27 = arith.constant 0 : index
    %c768 = arith.constant 768 : index
    %48 = vector.load %arg4[%c0_27, %c768] : memref<32x1920xbf16, #tpu.memory_space<vmem>>, vector<32x32xbf16>
    %49 = arith.truncf %3 : vector<16x32xf32> to vector<16x32xbf16>
    %cst_28 = arith.constant dense<0.000000e+00> : vector<16x32xf32>
    %50 = tpu.matmul %49, %48, %cst_28 {dimension_numbers = #tpu.dot_dimension_numbers<[1], [0], [0], [1], [0, 0, 1, 1], [], []>} : vector<16x32xbf16>, vector<32x32xbf16>, vector<16x32xf32> -> vector<16x32xf32>
    %c0_29 = arith.constant 0 : index
    %c896 = arith.constant 896 : index
    %51 = vector.load %arg4[%c0_29, %c896] : memref<32x1920xbf16, #tpu.memory_space<vmem>>, vector<32x32xbf16>
    %52 = arith.truncf %3 : vector<16x32xf32> to vector<16x32xbf16>
    %cst_30 = arith.constant dense<0.000000e+00> : vector<16x32xf32>
    %53 = tpu.matmul %52, %51, %cst_30 {dimension_numbers = #tpu.dot_dimension_numbers<[1], [0], [0], [1], [0, 0, 1, 1], [], []>} : vector<16x32xbf16>, vector<32x32xbf16>, vector<16x32xf32> -> vector<16x32xf32>
    %54 = arith.truncf %47 : vector<16x32xf32> to vector<16x32xbf16>
    %55 = arith.truncf %50 : vector<16x32xf32> to vector<16x32xbf16>
    %cst_31 = arith.constant dense<0.000000e+00> : vector<16x16xf32>
    %56 = tpu.matmul %54, %55, %cst_31 {dimension_numbers = #tpu.dot_dimension_numbers<[1], [1], [0], [0], [0, 0, 1, 0], [], []>} : vector<16x32xbf16>, vector<16x32xbf16>, vector<16x16xf32> -> vector<16x16xf32>
    %57 = arith.addf %56, %5 : vector<16x16xf32>
    %cst_32 = arith.constant dense<0xFF800000> : vector<16xf32>
    %58 = vector.multi_reduction <maximumf>, %57, %cst_32 [1] : vector<16x16xf32> to vector<16xf32>
    %59 = vector.shape_cast %58 : vector<16xf32> to vector<16x1xf32>
    %60 = vector.broadcast %59 : vector<16x1xf32> to vector<16x16xf32>
    %61 = arith.subf %57, %60 : vector<16x16xf32>
    %62 = math.exp %61 : vector<16x16xf32>
    %cst_33 = arith.constant dense<0.000000e+00> : vector<16xf32>
    %63 = vector.multi_reduction <add>, %62, %cst_33 [1] : vector<16x16xf32> to vector<16xf32>
    %64 = vector.shape_cast %63 : vector<16xf32> to vector<16x1xf32>
    %65 = tpu.reciprocal %64 {approx = true} : vector<16x1xf32> -> vector<16x1xf32>
    %66 = vector.broadcast %65 : vector<16x1xf32> to vector<16x16xf32>
    %67 = arith.mulf %62, %66 : vector<16x16xf32>
    %68 = arith.truncf %67 : vector<16x16xf32> to vector<16x16xbf16>
    %69 = arith.truncf %53 : vector<16x32xf32> to vector<16x32xbf16>
    %cst_34 = arith.constant dense<0.000000e+00> : vector<16x32xf32>
    %70 = tpu.matmul %68, %69, %cst_34 {dimension_numbers = #tpu.dot_dimension_numbers<[1], [0], [0], [1], [0, 0, 1, 1], [], []>} : vector<16x16xbf16>, vector<16x32xbf16>, vector<16x32xf32> -> vector<16x32xf32>
    %c0_35 = arith.constant 0 : index
    %c1024 = arith.constant 1024 : index
    %71 = vector.load %arg4[%c0_35, %c1024] : memref<32x1920xbf16, #tpu.memory_space<vmem>>, vector<32x32xbf16>
    %72 = arith.truncf %70 : vector<16x32xf32> to vector<16x32xbf16>
    %cst_36 = arith.constant dense<0.000000e+00> : vector<16x32xf32>
    %73 = tpu.matmul %72, %71, %cst_36 {dimension_numbers = #tpu.dot_dimension_numbers<[1], [0], [0], [1], [0, 0, 1, 1], [], []>} : vector<16x32xbf16>, vector<32x32xbf16>, vector<16x32xf32> -> vector<16x32xf32>
    %74 = arith.addf %3, %73 : vector<16x32xf32>
    %c0_37 = arith.constant 0 : index
    %c1152 = arith.constant 1152 : index
    %75 = vector.load %arg4[%c0_37, %c1152] : memref<32x1920xbf16, #tpu.memory_space<vmem>>, vector<32x32xbf16>
    %76 = arith.truncf %74 : vector<16x32xf32> to vector<16x32xbf16>
    %cst_38 = arith.constant dense<0.000000e+00> : vector<16x32xf32>
    %77 = tpu.matmul %76, %75, %cst_38 {dimension_numbers = #tpu.dot_dimension_numbers<[1], [0], [0], [1], [0, 0, 1, 1], [], []>} : vector<16x32xbf16>, vector<32x32xbf16>, vector<16x32xf32> -> vector<16x32xf32>
    %c0_39 = arith.constant 0 : index
    %c1280 = arith.constant 1280 : index
    %78 = vector.load %arg4[%c0_39, %c1280] : memref<32x1920xbf16, #tpu.memory_space<vmem>>, vector<32x32xbf16>
    %79 = arith.truncf %44 : vector<16x32xf32> to vector<16x32xbf16>
    %cst_40 = arith.constant dense<0.000000e+00> : vector<16x32xf32>
    %80 = tpu.matmul %79, %78, %cst_40 {dimension_numbers = #tpu.dot_dimension_numbers<[1], [0], [0], [1], [0, 0, 1, 1], [], []>} : vector<16x32xbf16>, vector<32x32xbf16>, vector<16x32xf32> -> vector<16x32xf32>
    %c0_41 = arith.constant 0 : index
    %c1408 = arith.constant 1408 : index
    %81 = vector.load %arg4[%c0_41, %c1408] : memref<32x1920xbf16, #tpu.memory_space<vmem>>, vector<32x32xbf16>
    %82 = arith.truncf %44 : vector<16x32xf32> to vector<16x32xbf16>
    %cst_42 = arith.constant dense<0.000000e+00> : vector<16x32xf32>
    %83 = tpu.matmul %82, %81, %cst_42 {dimension_numbers = #tpu.dot_dimension_numbers<[1], [0], [0], [1], [0, 0, 1, 1], [], []>} : vector<16x32xbf16>, vector<32x32xbf16>, vector<16x32xf32> -> vector<16x32xf32>
    %84 = arith.truncf %77 : vector<16x32xf32> to vector<16x32xbf16>
    %85 = arith.truncf %80 : vector<16x32xf32> to vector<16x32xbf16>
    %cst_43 = arith.constant dense<0.000000e+00> : vector<16x16xf32>
    %86 = tpu.matmul %84, %85, %cst_43 {dimension_numbers = #tpu.dot_dimension_numbers<[1], [1], [0], [0], [0, 0, 1, 0], [], []>} : vector<16x32xbf16>, vector<16x32xbf16>, vector<16x16xf32> -> vector<16x16xf32>
    %87 = arith.addf %86, %4 : vector<16x16xf32>
    %cst_44 = arith.constant dense<0xFF800000> : vector<16xf32>
    %88 = vector.multi_reduction <maximumf>, %87, %cst_44 [1] : vector<16x16xf32> to vector<16xf32>
    %89 = vector.shape_cast %88 : vector<16xf32> to vector<16x1xf32>
    %90 = vector.broadcast %89 : vector<16x1xf32> to vector<16x16xf32>
    %91 = arith.subf %87, %90 : vector<16x16xf32>
    %92 = math.exp %91 : vector<16x16xf32>
    %cst_45 = arith.constant dense<0.000000e+00> : vector<16xf32>
    %93 = vector.multi_reduction <add>, %92, %cst_45 [1] : vector<16x16xf32> to vector<16xf32>
    %94 = vector.shape_cast %93 : vector<16xf32> to vector<16x1xf32>
    %95 = tpu.reciprocal %94 {approx = true} : vector<16x1xf32> -> vector<16x1xf32>
    %96 = vector.broadcast %95 : vector<16x1xf32> to vector<16x16xf32>
    %97 = arith.mulf %92, %96 : vector<16x16xf32>
    %98 = arith.truncf %97 : vector<16x16xf32> to vector<16x16xbf16>
    %99 = arith.truncf %83 : vector<16x32xf32> to vector<16x32xbf16>
    %cst_46 = arith.constant dense<0.000000e+00> : vector<16x32xf32>
    %100 = tpu.matmul %98, %99, %cst_46 {dimension_numbers = #tpu.dot_dimension_numbers<[1], [0], [0], [1], [0, 0, 1, 1], [], []>} : vector<16x16xbf16>, vector<16x32xbf16>, vector<16x32xf32> -> vector<16x32xf32>
    %c0_47 = arith.constant 0 : index
    %c1536 = arith.constant 1536 : index
    %101 = vector.load %arg4[%c0_47, %c1536] : memref<32x1920xbf16, #tpu.memory_space<vmem>>, vector<32x32xbf16>
    %102 = arith.truncf %100 : vector<16x32xf32> to vector<16x32xbf16>
    %cst_48 = arith.constant dense<0.000000e+00> : vector<16x32xf32>
    %103 = tpu.matmul %102, %101, %cst_48 {dimension_numbers = #tpu.dot_dimension_numbers<[1], [0], [0], [1], [0, 0, 1, 1], [], []>} : vector<16x32xbf16>, vector<32x32xbf16>, vector<16x32xf32> -> vector<16x32xf32>
    %104 = arith.addf %74, %103 : vector<16x32xf32>
    %c0_49 = arith.constant 0 : index
    %c1664 = arith.constant 1664 : index
    %105 = vector.load %arg4[%c0_49, %c1664] : memref<32x1920xbf16, #tpu.memory_space<vmem>>, vector<32x64xbf16>
    %106 = arith.truncf %104 : vector<16x32xf32> to vector<16x32xbf16>
    %cst_50 = arith.constant dense<0.000000e+00> : vector<16x64xf32>
    %107 = tpu.matmul %106, %105, %cst_50 {dimension_numbers = #tpu.dot_dimension_numbers<[1], [0], [0], [1], [0, 0, 1, 1], [], []>} : vector<16x32xbf16>, vector<32x64xbf16>, vector<16x64xf32> -> vector<16x64xf32>
    %cst_51 = arith.constant 0.000000e+00 : f32
    %108 = vector.broadcast %cst_51 : f32 to vector<16x64xf32>
    %109 = arith.maximumf %107, %108 : vector<16x64xf32>
    %c0_52 = arith.constant 0 : index
    %c128_53 = arith.constant 128 : index
    %110 = vector.load %arg5[%c0_52, %c128_53] : memref<64x256xbf16, #tpu.memory_space<vmem>>, vector<64x32xbf16>
    %111 = arith.truncf %109 : vector<16x64xf32> to vector<16x64xbf16>
    %cst_54 = arith.constant dense<0.000000e+00> : vector<16x32xf32>
    %112 = tpu.matmul %111, %110, %cst_54 {dimension_numbers = #tpu.dot_dimension_numbers<[1], [0], [0], [1], [0, 0, 1, 1], [], []>} : vector<16x64xbf16>, vector<64x32xbf16>, vector<16x32xf32> -> vector<16x32xf32>
    %113 = arith.addf %104, %112 : vector<16x32xf32>
    %c0_55 = arith.constant 0 : index
    %c1792 = arith.constant 1792 : index
    %114 = vector.load %arg4[%c0_55, %c1792] : memref<32x1920xbf16, #tpu.memory_space<vmem>>, vector<32x128xbf16>
    %115 = arith.truncf %113 : vector<16x32xf32> to vector<16x32xbf16>
    %cst_56 = arith.constant dense<0.000000e+00> : vector<16x128xf32>
    %116 = tpu.matmul %115, %114, %cst_56 {dimension_numbers = #tpu.dot_dimension_numbers<[1], [0], [0], [1], [0, 0, 1, 1], [], []>} : vector<16x32xbf16>, vector<32x128xbf16>, vector<16x128xf32> -> vector<16x128xf32>
    %c0_57 = arith.constant 0 : index
    %c0_58 = arith.constant 0 : index
    %117 = vector.load %arg6[%c0_57, %c0_58] : memref<16x128xf32, #tpu.memory_space<vmem>>, vector<16x128xf32>
    tpu.vector_store %arg6[%c0_57, %c0_58], %116 {strides = array<i32>} : memref<16x128xf32, #tpu.memory_space<vmem>>, vector<16x128xf32>,
    return
  }
}

</mosaic_0001>

<llo_original>
// kernel: ms2mol_wrapper_generator_forward.1
$region0: #{ms2mol_wrapper_generator_forward.1}
  #allocation0 [shape = 'u32[]', space=smem, size = 0x4, offset = 0x4, fixed_abs, tag = 'smem constant byte address 0x4 - core index']
  #allocation1 [shape = 'u32[144,128]{1,0:T(1,128)}', space=vmem, size = 0x12000, scoped, tag = 'internal scratch']
  %s0 = inlined_call_operand.vmem [shape: bf16[16,32], index: 0, kind: input, shape index: {}]
  %s1 = inlined_call_operand.vmem [shape: bf16[16,32], index: 1, kind: input, shape index: {}]
  %s2 = inlined_call_operand.vmem [shape: f32[16,16], index: 2, kind: input, shape index: {}]
  %s3 = inlined_call_operand.vmem [shape: f32[16,16], index: 3, kind: input, shape index: {}]
  %s4 = inlined_call_operand.vmem [shape: bf16[32,1920], index: 4, kind: input, shape index: {}]
  %s5 = inlined_call_operand.vmem [shape: bf16[64,256], index: 5, kind: input, shape index: {}]
  %s6 = inlined_call_operand.vmem [shape: f32[16,128], index: 6, kind: output, shape index: {}]
  %s7 = sld [smem:[#allocation0]]
  $region34: #{ms2mol_wrapper_generator_forward.1} parent=0
    _
  %s9 = ssub.s32 1, %s7
  %s10 = scalar_select 0, %s9, %s7
  // Predicated region
  $region2: #{ms2mol_wrapper_generator_forward.1} parent=0 // pred_check
    _
  $region3: #{ms2mol_wrapper_generator_forward.1} parent=0 // pred_check_branch
    %12 = sbr.rel (0) target = $region5
  $region4: #{ms2mol_wrapper_generator_forward.1} parent=0 // pred_region
    _
  $region5: #{ms2mol_wrapper_generator_forward.1} parent=0 // pred_fallthru
    _
  // Predicated region
  $region6: #{ms2mol_wrapper_generator_forward.1} parent=0 // pred_check
    _
  $region7: #{ms2mol_wrapper_generator_forward.1} parent=0 // pred_check_branch
    %14 = sbr.rel (0) target = $region9
  $region8: #{ms2mol_wrapper_generator_forward.1} parent=0 // pred_region
    _
  $region9: #{ms2mol_wrapper_generator_forward.1} parent=0 // pred_fallthru
    _
  // Predicated region
  $region10: #{ms2mol_wrapper_generator_forward.1} parent=0 // pred_check
    _
  $region11: #{ms2mol_wrapper_generator_forward.1} parent=0 // pred_check_branch
    %16 = sbr.rel (0) target = $region13
  $region12: #{ms2mol_wrapper_generator_forward.1} parent=0 // pred_region
    _
  $region13: #{ms2mol_wrapper_generator_forward.1} parent=0 // pred_fallthru
    _
  // Predicated region
  $region14: #{ms2mol_wrapper_generator_forward.1} parent=0 // pred_check
    _
  $region15: #{ms2mol_wrapper_generator_forward.1} parent=0 // pred_check_branch
    %18 = sbr.rel (0) target = $region17
  $region16: #{ms2mol_wrapper_generator_forward.1} parent=0 // pred_region
    _
  $region17: #{ms2mol_wrapper_generator_forward.1} parent=0 // pred_fallthru
    _
  // Predicated region
  $region18: #{ms2mol_wrapper_generator_forward.1} parent=0 // pred_check
    _
  $region19: #{ms2mol_wrapper_generator_forward.1} parent=0 // pred_check_branch
    %20 = sbr.rel (0) target = $region21
  $region20: #{ms2mol_wrapper_generator_forward.1} parent=0 // pred_region
    _
  $region21: #{ms2mol_wrapper_generator_forward.1} parent=0 // pred_fallthru
    _
  // Predicated region
  $region22: #{ms2mol_wrapper_generator_forward.1} parent=0 // pred_check
    _
  $region23: #{ms2mol_wrapper_generator_forward.1} parent=0 // pred_check_branch
    %22 = sbr.rel (0) target = $region25
  $region24: #{ms2mol_wrapper_generator_forward.1} parent=0 // pred_region
    _
  $region25: #{ms2mol_wrapper_generator_forward.1} parent=0 // pred_fallthru
    _
  %v24 = vld [vmem:[%s0] sm:$0xf]
  %v25 = vld [vmem:[%s0 + $0x4] sm:$0xf]
  %v26 = vunpack.c.l.bf16 %v24
  %v27 = vunpack.c.l.bf16 %v25
  %v28 = vld [vmem:[%s1] sm:$0xf]
  %v29 = vld [vmem:[%s1 + $0x4] sm:$0xf]
  %v30 = vunpack.c.l.bf16 %v28
  %v31 = vunpack.c.l.bf16 %v29
  %v32 = vld [vmem:[%s2] sm:$0xff]
  %v33 = vld [vmem:[%s2 + $0x8] sm:$0xff]
  %v34 = vld [vmem:[%s3] sm:$0xff]
  %v35 = vld [vmem:[%s3 + $0x8] sm:$0xff]
  %v36 = vld [vmem:[%s4] sm:$0xf]
  %v37 = vld [vmem:[%s4 + $0x3c] sm:$0xf]
  %v38 = vld [vmem:[%s4 + $0x78] sm:$0xf]
  %v39 = vld [vmem:[%s4 + $0xb4] sm:$0xf]
  %v42 = vunpack.c.l.b16 %v24
  %v43 = vunpack.c.l.b16 %v25
  %v44 = vpack.c.b16 %v43, %v42
  %v49 = vunpack.c.l.b16 %v36
  %v50 = vunpack.c.l.b16 %v37
  %v51 = vunpack.c.l.b16 %v38
  %v52 = vunpack.c.l.b16 %v39
  %v53 = vpack.c.b16 %v50, %v49
  %v54 = vpack.c.b16 %v52, %v51
  %vm57 = vcmask 261120
  %v59 = vsel %vm57, %v44, 0
  %61 = vmatprep.subr.bf16.mxu0 0
  %62 = vmatpush1.bf16.msra.mxu0 %v53
  %63 = vmatprep.subr.bf16.mxu0 0
  %64 = vmatpush1.bf16.msra.mxu0 %v54
  %65 = vmatprep.subr.bf16.mxu0 0
  %66 = vmatpush1.bf16.msra.mxu0 0
  %67 = vmatprep.subr.bf16.mxu0 0
  %68 = vmatpush1.bf16.msra.mxu0 0
  %69 = vmatprep.subr.bf16.mxu0 0
  %70 = vmatpush1.bf16.msra.mxu0 0
  %71 = vmatprep.subr.bf16.mxu0 0
  %72 = vmatpush1.bf16.msra.mxu0 0
  %73 = vmatprep.subr.bf16.mxu0 0
  %74 = vmatpush1.bf16.msra.mxu0 0
  %75 = vmatprep.subr.bf16.mxu0 0
  %76 = vmatpush1.bf16.msra.mxu0 0
  %77 = vmatprep.subr.bf16.mxu0 0
  %78 = vmatpush1.bf16.msra.mxu0 0
  %79 = vmatprep.subr.bf16.mxu0 0
  %80 = vmatpush1.bf16.msra.mxu0 0
  %81 = vmatprep.subr.bf16.mxu0 0
  %82 = vmatpush1.bf16.msra.mxu0 0
  %83 = vmatprep.subr.bf16.mxu0 0
  %84 = vmatpush1.bf16.msra.mxu0 0
  %85 = vmatprep.subr.bf16.mxu0 0
  %86 = vmatpush1.bf16.msra.mxu0 0
  %87 = vmatprep.subr.bf16.mxu0 0
  %88 = vmatpush1.bf16.msra.mxu0 0
  %89 = vmatprep.subr.bf16.mxu0 0
  %90 = vmatpush1.bf16.msra.mxu0 0
  %91 = vmatprep.subr.bf16.mxu0 0
  %92 = vmatpush1.bf16.msra.mxu0 0
  %93 = vmatprep.mubr.bf16.mxu0 0
  %94 = vmatmul.mubr.bf16.gmra.mrb[0].mxu0 %v59
  %v95 = vpop.f32.mrb[0].mxu0
  %v96 = vadd.f32 0.0, %v95
  %v97 = vpop.f32.mrb[0].mxu0
  %v98 = vpop.f32.mrb[0].mxu0
  %v99 = vadd.f32 0.0, %v98
  %v100 = vpop.f32.mrb[0].mxu0
  %101 = vdwg.mxu0
  %v102 = vld [vmem:[%s4 + $0x4] sm:$0xf]
  %v103 = vld [vmem:[%s4 + $0x40] sm:$0xf]
  %v104 = vld [vmem:[%s4 + $0x7c] sm:$0xf]
  %v105 = vld [vmem:[%s4 + $0xb8] sm:$0xf]
  %v110 = vunpack.c.l.b16 %v102
  %v111 = vunpack.c.l.b16 %v103
  %v112 = vunpack.c.l.b16 %v104
  %v113 = vunpack.c.l.b16 %v105
  %v114 = vpack.c.b16 %v111, %v110
  %v115 = vpack.c.b16 %v113, %v112
  %118 = vmatprep.subr.bf16.mxu0 0
  %119 = vmatpush1.bf16.msra.mxu0 %v114
  %120 = vmatprep.subr.bf16.mxu0 0
  %121 = vmatpush1.bf16.msra.mxu0 %v115
  %122 = vmatprep.subr.bf16.mxu0 0
  %123 = vmatpush1.bf16.msra.mxu0 0
  %124 = vmatprep.subr.bf16.mxu0 0
  %125 = vmatpush1.bf16.msra.mxu0 0
  %126 = vmatprep.subr.bf16.mxu0 0
  %127 = vmatpush1.bf16.msra.mxu0 0
  %128 = vmatprep.subr.bf16.mxu0 0
  %129 = vmatpush1.bf16.msra.mxu0 0
  %130 = vmatprep.subr.bf16.mxu0 0
  %131 = vmatpush1.bf16.msra.mxu0 0
  %132 = vmatprep.subr.bf16.mxu0 0
  %133 = vmatpush1.bf16.msra.mxu0 0
  %134 = vmatprep.subr.bf16.mxu0 0
  %135 = vmatpush1.bf16.msra.mxu0 0
  %136 = vmatprep.subr.bf16.mxu0 0
  %137 = vmatpush1.bf16.msra.mxu0 0
  %138 = vmatprep.subr.bf16.mxu0 0
  %139 = vmatpush1.bf16.msra.mxu0 0
  %140 = vmatprep.subr.bf16.mxu0 0
  %141 = vmatpush1.bf16.msra.mxu0 0
  %142 = vmatprep.subr.bf16.mxu0 0
  %143 = vmatpush1.bf16.msra.mxu0 0
  %144 = vmatprep.subr.bf16.mxu0 0
  %145 = vmatpush1.bf16.msra.mxu0 0
  %146 = vmatprep.subr.bf16.mxu0 0
  %147 = vmatpush1.bf16.msra.mxu0 0
  %148 = vmatprep.subr.bf16.mxu0 0
  %149 = vmatpush1.bf16.msra.mxu0 0
  %150 = vmatprep.mubr.bf16.mxu0 0
  %151 = vmatmul.mubr.bf16.gmra.mrb[0].mxu0 %v59
  %v152 = vpop.f32.mrb[0].mxu0
  %v153 = vadd.f32 0.0, %v152
  %v154 = vpop.f32.mrb[0].mxu0
  %v155 = vpop.f32.mrb[0].mxu0
  %v156 = vadd.f32 0.0, %v155
  %v157 = vpop.f32.mrb[0].mxu0
  %158 = vdwg.mxu0
  %v159 = vld [vmem:[%s4 + $0x8] sm:$0xf]
  %v160 = vld [vmem:[%s4 + $0x44] sm:$0xf]
  %v161 = vld [vmem:[%s4 + $0x80] sm:$0xf]
  %v162 = vld [vmem:[%s4 + $0xbc] sm:$0xf]
  %v167 = vunpack.c.l.b16 %v159
  %v168 = vunpack.c.l.b16 %v160
  %v169 = vunpack.c.l.b16 %v161
  %v170 = vunpack.c.l.b16 %v162
  %v171 = vpack.c.b16 %v168, %v167
  %v172 = vpack.c.b16 %v170, %v169
  %175 = vmatprep.subr.bf16.mxu0 0
  %176 = vmatpush1.bf16.msra.mxu0 %v171
  %177 = vmatprep.subr.bf16.mxu0 0
  %178 = vmatpush1.bf16.msra.mxu0 %v172
  %179 = vmatprep.subr.bf16.mxu0 0
  %180 = vmatpush1.bf16.msra.mxu0 0
  %181 = vmatprep.subr.bf16.mxu0 0
  %182 = vmatpush1.bf16.msra.mxu0 0
  %183 = vmatprep.subr.bf16.mxu0 0
  %184 = vmatpush1.bf16.msra.mxu0 0
  %185 = vmatprep.subr.bf16.mxu0 0
  %186 = vmatpush1.bf16.msra.mxu0 0
  %187 = vmatprep.subr.bf16.mxu0 0
  %188 = vmatpush1.bf16.msra.mxu0 0
  %189 = vmatprep.subr.bf16.mxu0 0
  %190 = vmatpush1.bf16.msra.mxu0 0
  %191 = vmatprep.subr.bf16.mxu0 0
  %192 = vmatpush1.bf16.msra.mxu0 0
  %193 = vmatprep.subr.bf16.mxu0 0
  %194 = vmatpush1.bf16.msra.mxu0 0
  %195 = vmatprep.subr.bf16.mxu0 0
  %196 = vmatpush1.bf16.msra.mxu0 0
  %197 = vmatprep.subr.bf16.mxu0 0
  %198 = vmatpush1.bf16.msra.mxu0 0
  %199 = vmatprep.subr.bf16.mxu0 0
  %200 = vmatpush1.bf16.msra.mxu0 0
  %201 = vmatprep.subr.bf16.mxu0 0
  %202 = vmatpush1.bf16.msra.mxu0 0
  %203 = vmatprep.subr.bf16.mxu0 0
  %204 = vmatpush1.bf16.msra.mxu0 0
  %205 = vmatprep.subr.bf16.mxu0 0
  %206 = vmatpush1.bf16.msra.mxu0 0
  %207 = vmatprep.mubr.bf16.mxu0 0
  %208 = vmatmul.mubr.bf16.gmra.mrb[0].mxu0 %v59
  %v209 = vpop.f32.mrb[0].mxu0
  %v210 = vadd.f32 0.0, %v209
  %v211 = vpop.f32.mrb[0].mxu0
  %v212 = vpop.f32.mrb[0].mxu0
  %v213 = vadd.f32 0.0, %v212
  %v214 = vpop.f32.mrb[0].mxu0
  %215 = vdwg.mxu0
  %v216 = vpack.c.bf16 %v99, %v96
  %v217 = vpack.c.bf16 %v156, %v153
  %v219 = vsel %vm57, %v216, 0
  %v222 = vsel %vm57, %v217, 0
  %224 = vmatprep.subr.bf16.mxu0 0
  %225 = vmatpush1.bf16.xpose.msra.mxu0 %v222
  %226 = vmatprep.subr.bf16.mxu0 0
  %227 = vmatpush1.bf16.xpose.msra.mxu0 0
  %228 = vmatprep.subr.bf16.mxu0 0
  %229 = vmatpush1.bf16.xpose.msra.mxu0 0
  %230 = vmatprep.subr.bf16.mxu0 0
  %231 = vmatpush1.bf16.xpose.msra.mxu0 0
  %232 = vmatprep.subr.bf16.mxu0 0
  %233 = vmatpush1.bf16.xpose.msra.mxu0 0
  %234 = vmatprep.subr.bf16.mxu0 0
  %235 = vmatpush1.bf16.xpose.msra.mxu0 0
  %236 = vmatprep.subr.bf16.mxu0 0
  %237 = vmatpush1.bf16.xpose.msra.mxu0 0
  %238 = vmatprep.subr.bf16.mxu0 0
  %239 = vmatpush1.bf16.xpose.msra.mxu0 0
  %240 = vmatprep.subr.bf16.mxu0 0
  %241 = vmatpush1.bf16.xpose.msra.mxu0 0
  %242 = vmatprep.subr.bf16.mxu0 0
  %243 = vmatpush1.bf16.xpose.msra.mxu0 0
  %244 = vmatprep.subr.bf16.mxu0 0
  %245 = vmatpush1.bf16.xpose.msra.mxu0 0
  %246 = vmatprep.subr.bf16.mxu0 0
  %247 = vmatpush1.bf16.xpose.msra.mxu0 0
  %248 = vmatprep.subr.bf16.mxu0 0
  %249 = vmatpush1.bf16.xpose.msra.mxu0 0
  %250 = vmatprep.subr.bf16.mxu0 0
  %251 = vmatpush1.bf16.xpose.msra.mxu0 0
  %252 = vmatprep.subr.bf16.mxu0 0
  %253 = vmatpush1.bf16.xpose.msra.mxu0 0
  %254 = vmatprep.subr.bf16.mxu0 0
  %255 = vmatpush1.bf16.xpose.msra.mxu0 0
  %256 = vmatprep.mubr.bf16.mxu0 0
  %257 = vmatmul.mubr.bf16.gmra.mrb[0].mxu0 %v219
  %v258 = vpop.f32.mrb[0].mxu0
  %v259 = vadd.f32 %v32, %v258
  %v260 = vpop.f32.mrb[0].mxu0
  %v261 = vpop.f32.mrb[0].mxu0
  %v262 = vadd.f32 %v33, %v261
  %v263 = vpop.f32.mrb[0].mxu0
  %264 = vdwg.mxu0
  %vm265 = vcmask 130048
  %v266 = vsel %vm265, %v259, -inf
  %267 = vmax.xlane.f32.xlu0 %v266
  %v268 = vpop.xlane.xlu0 %267
  %v269 = vsel %vm265, %v262, -inf
  %270 = vmax.xlane.f32.xlu0 %v269
  %v271 = vpop.xlane.xlu0 %270
  %v272 = vsub.f32 %v259, %v268
  %v273 = vsub.f32 %v262, %v271
  %v274 = vmul.f32 %v272, 1.442695
  %v275 = vpow.pop %v274
  %v276 = vmul.f32 %v273, 1.442695
  %v277 = vpow.pop %v276
  %v278 = vsel %vm265, %v275, 0.0
  %279 = vadd.xlane.f32.xlu0 %v278
  %v280 = vpop.xlane.xlu0 %279
  %v281 = vsel %vm265, %v277, 0.0
  %282 = vadd.xlane.f32.xlu0 %v281
  %v283 = vpop.xlane.xlu0 %282
  %v284 = vrcp.pop %v280
  %v285 = vrcp.pop %v283
  %v286 = vmul.f32 %v275, %v284
  %v287 = vmul.f32 %v277, %v285
  %v288 = vpack.c.bf16 %v287, %v286
  %v289 = vpack.c.bf16 %v213, %v210
  %v291 = vsel %vm265, %v288, 0
  %293 = vmatprep.subr.bf16.mxu0 0
  %294 = vmatpush1.bf16.msra.mxu0 %v289
  %295 = vmatprep.subr.bf16.mxu0 0
  %296 = vmatpush1.bf16.msra.mxu0 0
  %297 = vmatprep.subr.bf16.mxu0 0
  %298 = vmatpush1.bf16.msra.mxu0 0
  %299 = vmatprep.subr.bf16.mxu0 0
  %300 = vmatpush1.bf16.msra.mxu0 0
  %301 = vmatprep.subr.bf16.mxu0 0
  %302 = vmatpush1.bf16.msra.mxu0 0
  %303 = vmatprep.subr.bf16.mxu0 0
  %304 = vmatpush1.bf16.msra.mxu0 0
  %305 = vmatprep.subr.bf16.mxu0 0
  %306 = vmatpush1.bf16.msra.mxu0 0
  %307 = vmatprep.subr.bf16.mxu0 0
  %308 = vmatpush1.bf16.msra.mxu0 0
  %309 = vmatprep.subr.bf16.mxu0 0
  %310 = vmatpush1.bf16.msra.mxu0 0
  %311 = vmatprep.subr.bf16.mxu0 0
  %312 = vmatpush1.bf16.msra.mxu0 0
  %313 = vmatprep.subr.bf16.mxu0 0
  %314 = vmatpush1.bf16.msra.mxu0 0
  %315 = vmatprep.subr.bf16.mxu0 0
  %316 = vmatpush1.bf16.msra.mxu0 0
  %317 = vmatprep.subr.bf16.mxu0 0
  %318 = vmatpush1.bf16.msra.mxu0 0
  %319 = vmatprep.subr.bf16.mxu0 0
  %320 = vmatpush1.bf16.msra.mxu0 0
  %321 = vmatprep.subr.bf16.mxu0 0
  %322 = vmatpush1.bf16.msra.mxu0 0
  %323 = vmatprep.subr.bf16.mxu0 0
  %324 = vmatpush1.bf16.msra.mxu0 0
  %325 = vmatprep.mubr.bf16.mxu0 0
  %326 = vmatmul.mubr.bf16.gmra.mrb[0].mxu0 %v291
  %v327 = vpop.f32.mrb[0].mxu0
  %v328 = vadd.f32 0.0, %v327
  %v329 = vpop.f32.mrb[0].mxu0
  %v330 = vpop.f32.mrb[0].mxu0
  %v331 = vadd.f32 0.0, %v330
  %v332 = vpop.f32.mrb[0].mxu0
  %333 = vdwg.mxu0
  %v334 = vld [vmem:[%s4 + $0xc] sm:$0xf]
  %v335 = vld [vmem:[%s4 + $0x48] sm:$0xf]
  %v336 = vld [vmem:[%s4 + $0x84] sm:$0xf]
  %v337 = vld [vmem:[%s4 + $0xc0] sm:$0xf]
  %v338 = vpack.c.bf16 %v331, %v328
  %v343 = vunpack.c.l.b16 %v334
  %v344 = vunpack.c.l.b16 %v335
  %v345 = vunpack.c.l.b16 %v336
  %v346 = vunpack.c.l.b16 %v337
  %v347 = vpack.c.b16 %v344, %v343
  %v348 = vpack.c.b16 %v346, %v345
  %v352 = vsel %vm57, %v338, 0
  %354 = vmatprep.subr.bf16.mxu0 0
  %355 = vmatpush1.bf16.msra.mxu0 %v347
  %356 = vmatprep.subr.bf16.mxu0 0
  %357 = vmatpush1.bf16.msra.mxu0 %v348
  %358 = vmatprep.subr.bf16.mxu0 0
  %359 = vmatpush1.bf16.msra.mxu0 0
  %360 = vmatprep.subr.bf16.mxu0 0
  %361 = vmatpush1.bf16.msra.mxu0 0
  %362 = vmatprep.subr.bf16.mxu0 0
  %363 = vmatpush1.bf16.msra.mxu0 0
  %364 = vmatprep.subr.bf16.mxu0 0
  %365 = vmatpush1.bf16.msra.mxu0 0
  %366 = vmatprep.subr.bf16.mxu0 0
  %367 = vmatpush1.bf16.msra.mxu0 0
  %368 = vmatprep.subr.bf16.mxu0 0
  %369 = vmatpush1.bf16.msra.mxu0 0
  %370 = vmatprep.subr.bf16.mxu0 0
  %371 = vmatpush1.bf16.msra.mxu0 0
  %372 = vmatprep.subr.bf16.mxu0 0
  %373 = vmatpush1.bf16.msra.mxu0 0
  %374 = vmatprep.subr.bf16.mxu0 0
  %375 = vmatpush1.bf16.msra.mxu0 0
  %376 = vmatprep.subr.bf16.mxu0 0
  %377 = vmatpush1.bf16.msra.mxu0 0
  %378 = vmatprep.subr.bf16.mxu0 0
  %379 = vmatpush1.bf16.msra.mxu0 0
  %380 = vmatprep.subr.bf16.mxu0 0
  %381 = vmatpush1.bf16.msra.mxu0 0
  %382 = vmatprep.subr.bf16.mxu0 0
  %383 = vmatpush1.bf16.msra.mxu0 0
  %384 = vmatprep.subr.bf16.mxu0 0
  %385 = vmatpush1.bf16.msra.mxu0 0
  %386 = vmatprep.mubr.bf16.mxu0 0
  %387 = vmatmul.mubr.bf16.gmra.mrb[0].mxu0 %v352
  %v388 = vpop.f32.mrb[0].mxu0
  %v389 = vadd.f32 0.0, %v388
  %v390 = vpop.f32.mrb[0].mxu0
  %v391 = vpop.f32.mrb[0].mxu0
  %v392 = vadd.f32 0.0, %v391
  %v393 = vpop.f32.mrb[0].mxu0
  %394 = vdwg.mxu0
  %v395 = vadd.f32 %v26, %v389
  %v396 = vadd.f32 %v27, %v392
  %v397 = vld [vmem:[%s4 + $0x10] sm:$0xf]
  %v398 = vld [vmem:[%s4 + $0x4c] sm:$0xf]
  %v399 = vld [vmem:[%s4 + $0x88] sm:$0xf]
  %v400 = vld [vmem:[%s4 + $0xc4] sm:$0xf]
  %v401 = vpack.c.bf16 %v396, %v395
  %v406 = vunpack.c.l.b16 %v397
  %v407 = vunpack.c.l.b16 %v398
  %v408 = vunpack.c.l.b16 %v399
  %v409 = vunpack.c.l.b16 %v400
  %v410 = vpack.c.b16 %v407, %v406
  %v411 = vpack.c.b16 %v409, %v408
  %v415 = vsel %vm57, %v401, 0
  %417 = vmatprep.subr.bf16.mxu0 0
  %418 = vmatpush1.bf16.msra.mxu0 %v410
  %419 = vmatprep.subr.bf16.mxu0 0
  %420 = vmatpush1.bf16.msra.mxu0 %v411
  %421 = vmatprep.subr.bf16.mxu0 0
  %422 = vmatpush1.bf16.msra.mxu0 0
  %423 = vmatprep.subr.bf16.mxu0 0
  %424 = vmatpush1.bf16.msra.mxu0 0
  %425 = vmatprep.subr.bf16.mxu0 0
  %426 = vmatpush1.bf16.msra.mxu0 0
  %427 = vmatprep.subr.bf16.mxu0 0
  %428 = vmatpush1.bf16.msra.mxu0 0
  %429 = vmatprep.subr.bf16.mxu0 0
  %430 = vmatpush1.bf16.msra.mxu0 0
  %431 = vmatprep.subr.bf16.mxu0 0
  %432 = vmatpush1.bf16.msra.mxu0 0
  %433 = vmatprep.subr.bf16.mxu0 0
  %434 = vmatpush1.bf16.msra.mxu0 0
  %435 = vmatprep.subr.bf16.mxu0 0
  %436 = vmatpush1.bf16.msra.mxu0 0
  %437 = vmatprep.subr.bf16.mxu0 0
  %438 = vmatpush1.bf16.msra.mxu0 0
  %439 = vmatprep.subr.bf16.mxu0 0
  %440 = vmatpush1.bf16.msra.mxu0 0
  %441 = vmatprep.subr.bf16.mxu0 0
  %442 = vmatpush1.bf16.msra.mxu0 0
  %443 = vmatprep.subr.bf16.mxu0 0
  %444 = vmatpush1.bf16.msra.mxu0 0
  %445 = vmatprep.subr.bf16.mxu0 0
  %446 = vmatpush1.bf16.msra.mxu0 0
  %447 = vmatprep.subr.bf16.mxu0 0
  %448 = vmatpush1.bf16.msra.mxu0 0
  %449 = vmatprep.mubr.bf16.mxu0 0
  %450 = vmatmul.mubr.bf16.gmra.mrb[0].mxu0 %v415
  %v451 = vpop.f32.mrb[0].mxu0
  %v452 = vadd.f32 0.0, %v451
  %v453 = vpop.f32.mrb[0].mxu0
  %v454 = vpop.f32.mrb[0].mxu0
  %v455 = vadd.f32 0.0, %v454
  %v456 = vpop.f32.mrb[0].mxu0
  %457 = vdwg.mxu0
  %v458 = vmax.f32 %v452, 0.0
  %v459 = vmax.f32 %v455, 0.0
  %v460 = vld [vmem:[%s5] sm:$0xf]
  %v461 = vld [vmem:[%s5 + $0x8] sm:$0xf]
  %v462 = vld [vmem:[%s5 + $0x10] sm:$0xf]
  %v463 = vld [vmem:[%s5 + $0x18] sm:$0xf]
  %v464 = vld [vmem:[%s5 + $0x20] sm:$0xf]
  %v465 = vld [vmem:[%s5 + $0x28] sm:$0xf]
  %v466 = vld [vmem:[%s5 + $0x30] sm:$0xf]
  %v467 = vld [vmem:[%s5 + $0x38] sm:$0xf]
  %v468 = vpack.c.bf16 %v459, %v458
  %v477 = vunpack.c.l.b16 %v460
  %v478 = vunpack.c.l.b16 %v461
  %v479 = vunpack.c.l.b16 %v462
  %v480 = vunpack.c.l.b16 %v463
  %v481 = vunpack.c.l.b16 %v464
  %v482 = vunpack.c.l.b16 %v465
  %v483 = vunpack.c.l.b16 %v466
  %v484 = vunpack.c.l.b16 %v467
  %v485 = vpack.c.b16 %v478, %v477
  %v486 = vpack.c.b16 %v480, %v479
  %v487 = vpack.c.b16 %v482, %v481
  %v488 = vpack.c.b16 %v484, %v483
  %vm493 = vcmask 523264
  %v495 = vsel %vm493, %v468, 0
  %497 = vmatprep.subr.bf16.mxu0 0
  %498 = vmatpush1.bf16.msra.mxu0 %v485
  %499 = vmatprep.subr.bf16.mxu0 0
  %500 = vmatpush1.bf16.msra.mxu0 %v486
  %501 = vmatprep.subr.bf16.mxu0 0
  %502 = vmatpush1.bf16.msra.mxu0 %v487
  %503 = vmatprep.subr.bf16.mxu0 0
  %504 = vmatpush1.bf16.msra.mxu0 %v488
  %505 = vmatprep.subr.bf16.mxu0 0
  %506 = vmatpush1.bf16.msra.mxu0 0
  %507 = vmatprep.subr.bf16.mxu0 0
  %508 = vmatpush1.bf16.msra.mxu0 0
  %509 = vmatprep.subr.bf16.mxu0 0
  %510 = vmatpush1.bf16.msra.mxu0 0
  %511 = vmatprep.subr.bf16.mxu0 0
  %512 = vmatpush1.bf16.msra.mxu0 0
  %513 = vmatprep.subr.bf16.mxu0 0
  %514 = vmatpush1.bf16.msra.mxu0 0
  %515 = vmatprep.subr.bf16.mxu0 0
  %516 = vmatpush1.bf16.msra.mxu0 0
  %517 = vmatprep.subr.bf16.mxu0 0
  %518 = vmatpush1.bf16.msra.mxu0 0
  %519 = vmatprep.subr.bf16.mxu0 0
  %520 = vmatpush1.bf16.msra.mxu0 0
  %521 = vmatprep.subr.bf16.mxu0 0
  %522 = vmatpush1.bf16.msra.mxu0 0
  %523 = vmatprep.subr.bf16.mxu0 0
  %524 = vmatpush1.bf16.msra.mxu0 0
  %525 = vmatprep.subr.bf16.mxu0 0
  %526 = vmatpush1.bf16.msra.mxu0 0
  %527 = vmatprep.subr.bf16.mxu0 0
  %528 = vmatpush1.bf16.msra.mxu0 0
  %529 = vmatprep.mubr.bf16.mxu0 0
  %530 = vmatmul.mubr.bf16.gmra.mrb[0].mxu0 %v495
  %v531 = vpop.f32.mrb[0].mxu0
  %v532 = vadd.f32 0.0, %v531
  %v533 = vpop.f32.mrb[0].mxu0
  %v534 = vpop.f32.mrb[0].mxu0
  %v535 = vadd.f32 0.0, %v534
  %v536 = vpop.f32.mrb[0].mxu0
  %537 = vdwg.mxu0
  %v538 = vadd.f32 %v395, %v532
  %v539 = vadd.f32 %v396, %v535
  %v540 = vld [vmem:[%s4 + $0x14] sm:$0xf]
  %v541 = vld [vmem:[%s4 + $0x50] sm:$0xf]
  %v542 = vld [vmem:[%s4 + $0x8c] sm:$0xf]
  %v543 = vld [vmem:[%s4 + $0xc8] sm:$0xf]
  %v546 = vunpack.c.l.b16 %v28
  %v547 = vunpack.c.l.b16 %v29
  %v548 = vpack.c.b16 %v547, %v546
  %v553 = vunpack.c.l.b16 %v540
  %v554 = vunpack.c.l.b16 %v541
  %v555 = vunpack.c.l.b16 %v542
  %v556 = vunpack.c.l.b16 %v543
  %v557 = vpack.c.b16 %v554, %v553
  %v558 = vpack.c.b16 %v556, %v555
  %v562 = vsel %vm57, %v548, 0
  %564 = vmatprep.subr.bf16.mxu0 0
  %565 = vmatpush1.bf16.msra.mxu0 %v557
  %566 = vmatprep.subr.bf16.mxu0 0
  %567 = vmatpush1.bf16.msra.mxu0 %v558
  %568 = vmatprep.subr.bf16.mxu0 0
  %569 = vmatpush1.bf16.msra.mxu0 0
  %570 = vmatprep.subr.bf16.mxu0 0
  %571 = vmatpush1.bf16.msra.mxu0 0
  %572 = vmatprep.subr.bf16.mxu0 0
  %573 = vmatpush1.bf16.msra.mxu0 0
  %574 = vmatprep.subr.bf16.mxu0 0
  %575 = vmatpush1.bf16.msra.mxu0 0
  %576 = vmatprep.subr.bf16.mxu0 0
  %577 = vmatpush1.bf16.msra.mxu0 0
  %578 = vmatprep.subr.bf16.mxu0 0
  %579 = vmatpush1.bf16.msra.mxu0 0
  %580 = vmatprep.subr.bf16.mxu0 0
  %581 = vmatpush1.bf16.msra.mxu0 0
  %582 = vmatprep.subr.bf16.mxu0 0
  %583 = vmatpush1.bf16.msra.mxu0 0
  %584 = vmatprep.subr.bf16.mxu0 0
  %585 = vmatpush1.bf16.msra.mxu0 0
  %586 = vmatprep.subr.bf16.mxu0 0
  %587 = vmatpush1.bf16.msra.mxu0 0
  %588 = vmatprep.subr.bf16.mxu0 0
  %589 = vmatpush1.bf16.msra.mxu0 0
  %590 = vmatprep.subr.bf16.mxu0 0
  %591 = vmatpush1.bf16.msra.mxu0 0
  %592 = vmatprep.subr.bf16.mxu0 0
  %593 = vmatpush1.bf16.msra.mxu0 0
  %594 = vmatprep.subr.bf16.mxu0 0
  %595 = vmatpush1.bf16.msra.mxu0 0
  %596 = vmatprep.mubr.bf16.mxu0 0
  %597 = vmatmul.mubr.bf16.gmra.mrb[0].mxu0 %v562
  %v598 = vpop.f32.mrb[0].mxu0
  %v599 = vadd.f32 0.0, %v598
  %v600 = vpop.f32.mrb[0].mxu0
  %v601 = vpop.f32.mrb[0].mxu0
  %v602 = vadd.f32 0.0, %v601
  %v603 = vpop.f32.mrb[0].mxu0
  %604 = vdwg.mxu0
  %v605 = vld [vmem:[%s4 + $0x18] sm:$0xf]
  %v606 = vld [vmem:[%s4 + $0x54] sm:$0xf]
  %v607 = vld [vmem:[%s4 + $0x90] sm:$0xf]
  %v608 = vld [vmem:[%s4 + $0xcc] sm:$0xf]
  %v613 = vunpack.c.l.b16 %v605
  %v614 = vunpack.c.l.b16 %v606
  %v615 = vunpack.c.l.b16 %v607
  %v616 = vunpack.c.l.b16 %v608
  %v617 = vpack.c.b16 %v614, %v613
  %v618 = vpack.c.b16 %v616, %v615
  %621 = vmatprep.subr.bf16.mxu0 0
  %622 = vmatpush1.bf16.msra.mxu0 %v617
  %623 = vmatprep.subr.bf16.mxu0 0
  %624 = vmatpush1.bf16.msra.mxu0 %v618
  %625 = vmatprep.subr.bf16.mxu0 0
  %626 = vmatpush1.bf16.msra.mxu0 0
  %627 = vmatprep.subr.bf16.mxu0 0
  %628 = vmatpush1.bf16.msra.mxu0 0
  %629 = vmatprep.subr.bf16.mxu0 0
  %630 = vmatpush1.bf16.msra.mxu0 0
  %631 = vmatprep.subr.bf16.mxu0 0
  %632 = vmatpush1.bf16.msra.mxu0 0
  %633 = vmatprep.subr.bf16.mxu0 0
  %634 = vmatpush1.bf16.msra.mxu0 0
  %635 = vmatprep.subr.bf16.mxu0 0
  %636 = vmatpush1.bf16.msra.mxu0 0
  %637 = vmatprep.subr.bf16.mxu0 0
  %638 = vmatpush1.bf16.msra.mxu0 0
  %639 = vmatprep.subr.bf16.mxu0 0
  %640 = vmatpush1.bf16.msra.mxu0 0
  %641 = vmatprep.subr.bf16.mxu0 0
  %642 = vmatpush1.bf16.msra.mxu0 0
  %643 = vmatprep.subr.bf16.mxu0 0
  %644 = vmatpush1.bf16.msra.mxu0 0
  %645 = vmatprep.subr.bf16.mxu0 0
  %646 = vmatpush1.bf16.msra.mxu0 0
  %647 = vmatprep.subr.bf16.mxu0 0
  %648 = vmatpush1.bf16.msra.mxu0 0
  %649 = vmatprep.subr.bf16.mxu0 0
  %650 = vmatpush1.bf16.msra.mxu0 0
  %651 = vmatprep.subr.bf16.mxu0 0
  %652 = vmatpush1.bf16.msra.mxu0 0
  %653 = vmatprep.mubr.bf16.mxu0 0
  %654 = vmatmul.mubr.bf16.gmra.mrb[0].mxu0 %v562
  %v655 = vpop.f32.mrb[0].mxu0
  %v656 = vadd.f32 0.0, %v655
  %v657 = vpop.f32.mrb[0].mxu0
  %v658 = vpop.f32.mrb[0].mxu0
  %v659 = vadd.f32 0.0, %v658
  %v660 = vpop.f32.mrb[0].mxu0
  %661 = vdwg.mxu0
  %v662 = vld [vmem:[%s4 + $0x1c] sm:$0xf]
  %v663 = vld [vmem:[%s4 + $0x58] sm:$0xf]
  %v664 = vld [vmem:[%s4 + $0x94] sm:$0xf]
  %v665 = vld [vmem:[%s4 + $0xd0] sm:$0xf]
  %v670 = vunpack.c.l.b16 %v662
  %v671 = vunpack.c.l.b16 %v663
  %v672 = vunpack.c.l.b16 %v664
  %v673 = vunpack.c.l.b16 %v665
  %v674 = vpack.c.b16 %v671, %v670
  %v675 = vpack.c.b16 %v673, %v672
  %678 = vmatprep.subr.bf16.mxu0 0
  %679 = vmatpush1.bf16.msra.mxu0 %v674
  %680 = vmatprep.subr.bf16.mxu0 0
  %681 = vmatpush1.bf16.msra.mxu0 %v675
  %682 = vmatprep.subr.bf16.mxu0 0
  %683 = vmatpush1.bf16.msra.mxu0 0
  %684 = vmatprep.subr.bf16.mxu0 0
  %685 = vmatpush1.bf16.msra.mxu0 0
  %686 = vmatprep.subr.bf16.mxu0 0
  %687 = vmatpush1.bf16.msra.mxu0 0
  %688 = vmatprep.subr.bf16.mxu0 0
  %689 = vmatpush1.bf16.msra.mxu0 0
  %690 = vmatprep.subr.bf16.mxu0 0
  %691 = vmatpush1.bf16.msra.mxu0 0
  %692 = vmatprep.subr.bf16.mxu0 0
  %693 = vmatpush1.bf16.msra.mxu0 0
  %694 = vmatprep.subr.bf16.mxu0 0
  %695 = vmatpush1.bf16.msra.mxu0 0
  %696 = vmatprep.subr.bf16.mxu0 0
  %697 = vmatpush1.bf16.msra.mxu0 0
  %698 = vmatprep.subr.bf16.mxu0 0
  %699 = vmatpush1.bf16.msra.mxu0 0
  %700 = vmatprep.subr.bf16.mxu0 0
  %701 = vmatpush1.bf16.msra.mxu0 0
  %702 = vmatprep.subr.bf16.mxu0 0
  %703 = vmatpush1.bf16.msra.mxu0 0
  %704 = vmatprep.subr.bf16.mxu0 0
  %705 = vmatpush1.bf16.msra.mxu0 0
  %706 = vmatprep.subr.bf16.mxu0 0
  %707 = vmatpush1.bf16.msra.mxu0 0
  %708 = vmatprep.subr.bf16.mxu0 0
  %709 = vmatpush1.bf16.msra.mxu0 0
  %710 = vmatprep.mubr.bf16.mxu0 0
  %711 = vmatmul.mubr.bf16.gmra.mrb[0].mxu0 %v562
  %v712 = vpop.f32.mrb[0].mxu0
  %v713 = vadd.f32 0.0, %v712
  %v714 = vpop.f32.mrb[0].mxu0
  %v715 = vpop.f32.mrb[0].mxu0
  %v716 = vadd.f32 0.0, %v715
  %v717 = vpop.f32.mrb[0].mxu0
  %718 = vdwg.mxu0
  %v719 = vpack.c.bf16 %v602, %v599
  %v720 = vpack.c.bf16 %v659, %v656
  %v722 = vsel %vm57, %v719, 0
  %v725 = vsel %vm57, %v720, 0
  %727 = vmatprep.subr.bf16.mxu0 0
  %728 = vmatpush1.bf16.xpose.msra.mxu0 %v725
  %729 = vmatprep.subr.bf16.mxu0 0
  %730 = vmatpush1.bf16.xpose.msra.mxu0 0
  %731 = vmatprep.subr.bf16.mxu0 0
  %732 = vmatpush1.bf16.xpose.msra.mxu0 0
  %733 = vmatprep.subr.bf16.mxu0 0
  %734 = vmatpush1.bf16.xpose.msra.mxu0 0
  %735 = vmatprep.subr.bf16.mxu0 0
  %736 = vmatpush1.bf16.xpose.msra.mxu0 0
  %737 = vmatprep.subr.bf16.mxu0 0
  %738 = vmatpush1.bf16.xpose.msra.mxu0 0
  %739 = vmatprep.subr.bf16.mxu0 0
  %740 = vmatpush1.bf16.xpose.msra.mxu0 0
  %741 = vmatprep.subr.bf16.mxu0 0
  %742 = vmatpush1.bf16.xpose.msra.mxu0 0
  %743 = vmatprep.subr.bf16.mxu0 0
  %744 = vmatpush1.bf16.xpose.msra.mxu0 0
  %745 = vmatprep.subr.bf16.mxu0 0
  %746 = vmatpush1.bf16.xpose.msra.mxu0 0
  %747 = vmatprep.subr.bf16.mxu0 0
  %748 = vmatpush1.bf16.xpose.msra.mxu0 0
  %749 = vmatprep.subr.bf16.mxu0 0
  %750 = vmatpush1.bf16.xpose.msra.mxu0 0
  %751 = vmatprep.subr.bf16.mxu0 0
  %752 = vmatpush1.bf16.xpose.msra.mxu0 0
  %753 = vmatprep.subr.bf16.mxu0 0
  %754 = vmatpush1.bf16.xpose.msra.mxu0 0
  %755 = vmatprep.subr.bf16.mxu0 0
  %756 = vmatpush1.bf16.xpose.msra.mxu0 0
  %757 = vmatprep.subr.bf16.mxu0 0
  %758 = vmatpush1.bf16.xpose.msra.mxu0 0
  %759 = vmatprep.mubr.bf16.mxu0 0
  %760 = vmatmul.mubr.bf16.gmra.mrb[0].mxu0 %v722
  %v761 = vpop.f32.mrb[0].mxu0
  %v762 = vadd.f32 %v34, %v761
  %v763 = vpop.f32.mrb[0].mxu0
  %v764 = vpop.f32.mrb[0].mxu0
  %v765 = vadd.f32 %v35, %v764
  %v766 = vpop.f32.mrb[0].mxu0
  %767 = vdwg.mxu0
  %v768 = vsel %vm265, %v762, -inf
  %769 = vmax.xlane.f32.xlu0 %v768
  %v770 = vpop.xlane.xlu0 %769
  %v771 = vsel %vm265, %v765, -inf
  %772 = vmax.xlane.f32.xlu0 %v771
  %v773 = vpop.xlane.xlu0 %772
  %v774 = vsub.f32 %v762, %v770
  %v775 = vsub.f32 %v765, %v773
  %v776 = vmul.f32 %v774, 1.442695
  %v777 = vpow.pop %v776
  %v778 = vmul.f32 %v775, 1.442695
  %v779 = vpow.pop %v778
  %v780 = vsel %vm265, %v777, 0.0
  %781 = vadd.xlane.f32.xlu0 %v780
  %v782 = vpop.xlane.xlu0 %781
  %v783 = vsel %vm265, %v779, 0.0
  %784 = vadd.xlane.f32.xlu0 %v783
  %v785 = vpop.xlane.xlu0 %784
  %v786 = vrcp.pop %v782
  %v787 = vrcp.pop %v785
  %v788 = vmul.f32 %v777, %v786
  %v789 = vmul.f32 %v779, %v787
  %v790 = vpack.c.bf16 %v789, %v788
  %v791 = vpack.c.bf16 %v716, %v713
  %v793 = vsel %vm265, %v790, 0
  %795 = vmatprep.subr.bf16.mxu0 0
  %796 = vmatpush1.bf16.msra.mxu0 %v791
  %797 = vmatprep.subr.bf16.mxu0 0
  %798 = vmatpush1.bf16.msra.mxu0 0
  %799 = vmatprep.subr.bf16.mxu0 0
  %800 = vmatpush1.bf16.msra.mxu0 0
  %801 = vmatprep.subr.bf16.mxu0 0
  %802 = vmatpush1.bf16.msra.mxu0 0
  %803 = vmatprep.subr.bf16.mxu0 0
  %804 = vmatpush1.bf16.msra.mxu0 0
  %805 = vmatprep.subr.bf16.mxu0 0
  %806 = vmatpush1.bf16.msra.mxu0 0
  %807 = vmatprep.subr.bf16.mxu0 0
  %808 = vmatpush1.bf16.msra.mxu0 0
  %809 = vmatprep.subr.bf16.mxu0 0
  %810 = vmatpush1.bf16.msra.mxu0 0
  %811 = vmatprep.subr.bf16.mxu0 0
  %812 = vmatpush1.bf16.msra.mxu0 0
  %813 = vmatprep.subr.bf16.mxu0 0
  %814 = vmatpush1.bf16.msra.mxu0 0
  %815 = vmatprep.subr.bf16.mxu0 0
  %816 = vmatpush1.bf16.msra.mxu0 0
  %817 = vmatprep.subr.bf16.mxu0 0
  %818 = vmatpush1.bf16.msra.mxu0 0
  %819 = vmatprep.subr.bf16.mxu0 0
  %820 = vmatpush1.bf16.msra.mxu0 0
  %821 = vmatprep.subr.bf16.mxu0 0
  %822 = vmatpush1.bf16.msra.mxu0 0
  %823 = vmatprep.subr.bf16.mxu0 0
  %824 = vmatpush1.bf16.msra.mxu0 0
  %825 = vmatprep.subr.bf16.mxu0 0
  %826 = vmatpush1.bf16.msra.mxu0 0
  %827 = vmatprep.mubr.bf16.mxu0 0
  %828 = vmatmul.mubr.bf16.gmra.mrb[0].mxu0 %v793
  %v829 = vpop.f32.mrb[0].mxu0
  %v830 = vadd.f32 0.0, %v829
  %v831 = vpop.f32.mrb[0].mxu0
  %v832 = vpop.f32.mrb[0].mxu0
  %v833 = vadd.f32 0.0, %v832
  %v834 = vpop.f32.mrb[0].mxu0
  %835 = vdwg.mxu0
  %v836 = vld [vmem:[%s4 + $0x20] sm:$0xf]
  %v837 = vld [vmem:[%s4 + $0x5c] sm:$0xf]
  %v838 = vld [vmem:[%s4 + $0x98] sm:$0xf]
  %v839 = vld [vmem:[%s4 + $0xd4] sm:$0xf]
  %v840 = vpack.c.bf16 %v833, %v830
  %v845 = vunpack.c.l.b16 %v836
  %v846 = vunpack.c.l.b16 %v837
  %v847 = vunpack.c.l.b16 %v838
  %v848 = vunpack.c.l.b16 %v839
  %v849 = vpack.c.b16 %v846, %v845
  %v850 = vpack.c.b16 %v848, %v847
  %v854 = vsel %vm57, %v840, 0
  %856 = vmatprep.subr.bf16.mxu0 0
  %857 = vmatpush1.bf16.msra.mxu0 %v849
  %858 = vmatprep.subr.bf16.mxu0 0
  %859 = vmatpush1.bf16.msra.mxu0 %v850
  %860 = vmatprep.subr.bf16.mxu0 0
  %861 = vmatpush1.bf16.msra.mxu0 0
  %862 = vmatprep.subr.bf16.mxu0 0
  %863 = vmatpush1.bf16.msra.mxu0 0
  %864 = vmatprep.subr.bf16.mxu0 0
  %865 = vmatpush1.bf16.msra.mxu0 0
  %866 = vmatprep.subr.bf16.mxu0 0
  %867 = vmatpush1.bf16.msra.mxu0 0
  %868 = vmatprep.subr.bf16.mxu0 0
  %869 = vmatpush1.bf16.msra.mxu0 0
  %870 = vmatprep.subr.bf16.mxu0 0
  %871 = vmatpush1.bf16.msra.mxu0 0
  %872 = vmatprep.subr.bf16.mxu0 0
  %873 = vmatpush1.bf16.msra.mxu0 0
  %874 = vmatprep.subr.bf16.mxu0 0
  %875 = vmatpush1.bf16.msra.mxu0 0
  %876 = vmatprep.subr.bf16.mxu0 0
  %877 = vmatpush1.bf16.msra.mxu0 0
  %878 = vmatprep.subr.bf16.mxu0 0
  %879 = vmatpush1.bf16.msra.mxu0 0
  %880 = vmatprep.subr.bf16.mxu0 0
  %881 = vmatpush1.bf16.msra.mxu0 0
  %882 = vmatprep.subr.bf16.mxu0 0
  %883 = vmatpush1.bf16.msra.mxu0 0
  %884 = vmatprep.subr.bf16.mxu0 0
  %885 = vmatpush1.bf16.msra.mxu0 0
  %886 = vmatprep.subr.bf16.mxu0 0
  %887 = vmatpush1.bf16.msra.mxu0 0
  %888 = vmatprep.mubr.bf16.mxu0 0
  %889 = vmatmul.mubr.bf16.gmra.mrb[0].mxu0 %v854
  %v890 = vpop.f32.mrb[0].mxu0
  %v891 = vadd.f32 0.0, %v890
  %v892 = vpop.f32.mrb[0].mxu0
  %v893 = vpop.f32.mrb[0].mxu0
  %v894 = vadd.f32 0.0, %v893
  %v895 = vpop.f32.mrb[0].mxu0
  %896 = vdwg.mxu0
  %v897 = vadd.f32 %v30, %v891
  %v898 = vadd.f32 %v31, %v894
  %v899 = vld [vmem:[%s4 + $0x24] sm:$0xf]
  %v900 = vld [vmem:[%s4 + $0x60] sm:$0xf]
  %v901 = vld [vmem:[%s4 + $0x9c] sm:$0xf]
  %v902 = vld [vmem:[%s4 + $0xd8] sm:$0xf]
  %v903 = vpack.c.bf16 %v898, %v897
  %v908 = vunpack.c.l.b16 %v899
  %v909 = vunpack.c.l.b16 %v900
  %v910 = vunpack.c.l.b16 %v901
  %v911 = vunpack.c.l.b16 %v902
  %v912 = vpack.c.b16 %v909, %v908
  %v913 = vpack.c.b16 %v911, %v910
  %v917 = vsel %vm57, %v903, 0
  %919 = vmatprep.subr.bf16.mxu0 0
  %920 = vmatpush1.bf16.msra.mxu0 %v912
  %921 = vmatprep.subr.bf16.mxu0 0
  %922 = vmatpush1.bf16.msra.mxu0 %v913
  %923 = vmatprep.subr.bf16.mxu0 0
  %924 = vmatpush1.bf16.msra.mxu0 0
  %925 = vmatprep.subr.bf16.mxu0 0
  %926 = vmatpush1.bf16.msra.mxu0 0
  %927 = vmatprep.subr.bf16.mxu0 0
  %928 = vmatpush1.bf16.msra.mxu0 0
  %929 = vmatprep.subr.bf16.mxu0 0
  %930 = vmatpush1.bf16.msra.mxu0 0
  %931 = vmatprep.subr.bf16.mxu0 0
  %932 = vmatpush1.bf16.msra.mxu0 0
  %933 = vmatprep.subr.bf16.mxu0 0
  %934 = vmatpush1.bf16.msra.mxu0 0
  %935 = vmatprep.subr.bf16.mxu0 0
  %936 = vmatpush1.bf16.msra.mxu0 0
  %937 = vmatprep.subr.bf16.mxu0 0
  %938 = vmatpush1.bf16.msra.mxu0 0
  %939 = vmatprep.subr.bf16.mxu0 0
  %940 = vmatpush1.bf16.msra.mxu0 0
  %941 = vmatprep.subr.bf16.mxu0 0
  %942 = vmatpush1.bf16.msra.mxu0 0
  %943 = vmatprep.subr.bf16.mxu0 0
  %944 = vmatpush1.bf16.msra.mxu0 0
  %945 = vmatprep.subr.bf16.mxu0 0
  %946 = vmatpush1.bf16.msra.mxu0 0
  %947 = vmatprep.subr.bf16.mxu0 0
  %948 = vmatpush1.bf16.msra.mxu0 0
  %949 = vmatprep.subr.bf16.mxu0 0
  %950 = vmatpush1.bf16.msra.mxu0 0
  %951 = vmatprep.mubr.bf16.mxu0 0
  %952 = vmatmul.mubr.bf16.gmra.mrb[0].mxu0 %v917
  %v953 = vpop.f32.mrb[0].mxu0
  %v954 = vadd.f32 0.0, %v953
  %v955 = vpop.f32.mrb[0].mxu0
  %v956 = vpop.f32.mrb[0].mxu0
  %v957 = vadd.f32 0.0, %v956
  %v958 = vpop.f32.mrb[0].mxu0
  %959 = vdwg.mxu0
  %v960 = vld [vmem:[%s4 + $0x28] sm:$0xf]
  %v961 = vld [vmem:[%s4 + $0x64] sm:$0xf]
  %v962 = vld [vmem:[%s4 + $0xa0] sm:$0xf]
  %v963 = vld [vmem:[%s4 + $0xdc] sm:$0xf]
  %v964 = vpack.c.bf16 %v539, %v538
  %v969 = vunpack.c.l.b16 %v960
  %v970 = vunpack.c.l.b16 %v961
  %v971 = vunpack.c.l.b16 %v962
  %v972 = vunpack.c.l.b16 %v963
  %v973 = vpack.c.b16 %v970, %v969
  %v974 = vpack.c.b16 %v972, %v971
  %v978 = vsel %vm57, %v964, 0
  %980 = vmatprep.subr.bf16.mxu0 0
  %981 = vmatpush1.bf16.msra.mxu0 %v973
  %982 = vmatprep.subr.bf16.mxu0 0
  %983 = vmatpush1.bf16.msra.mxu0 %v974
  %984 = vmatprep.subr.bf16.mxu0 0
  %985 = vmatpush1.bf16.msra.mxu0 0
  %986 = vmatprep.subr.bf16.mxu0 0
  %987 = vmatpush1.bf16.msra.mxu0 0
  %988 = vmatprep.subr.bf16.mxu0 0
  %989 = vmatpush1.bf16.msra.mxu0 0
  %990 = vmatprep.subr.bf16.mxu0 0
  %991 = vmatpush1.bf16.msra.mxu0 0
  %992 = vmatprep.subr.bf16.mxu0 0
  %993 = vmatpush1.bf16.msra.mxu0 0
  %994 = vmatprep.subr.bf16.mxu0 0
  %995 = vmatpush1.bf16.msra.mxu0 0
  %996 = vmatprep.subr.bf16.mxu0 0
  %997 = vmatpush1.bf16.msra.mxu0 0
  %998 = vmatprep.subr.bf16.mxu0 0
  %999 = vmatpush1.bf16.msra.mxu0 0
  %1000 = vmatprep.subr.bf16.mxu0 0
  %1001 = vmatpush1.bf16.msra.mxu0 0
  %1002 = vmatprep.subr.bf16.mxu0 0
  %1003 = vmatpush1.bf16.msra.mxu0 0
  %1004 = vmatprep.subr.bf16.mxu0 0
  %1005 = vmatpush1.bf16.msra.mxu0 0
  %1006 = vmatprep.subr.bf16.mxu0 0
  %1007 = vmatpush1.bf16.msra.mxu0 0
  %1008 = vmatprep.subr.bf16.mxu0 0
  %1009 = vmatpush1.bf16.msra.mxu0 0
  %1010 = vmatprep.subr.bf16.mxu0 0
  %1011 = vmatpush1.bf16.msra.mxu0 0
  %1012 = vmatprep.mubr.bf16.mxu0 0
  %1013 = vmatmul.mubr.bf16.gmra.mrb[0].mxu0 %v978
  %v1014 = vpop.f32.mrb[0].mxu0
  %v1015 = vadd.f32 0.0, %v1014
  %v1016 = vpop.f32.mrb[0].mxu0
  %v1017 = vpop.f32.mrb[0].mxu0
  %v1018 = vadd.f32 0.0, %v1017
  %v1019 = vpop.f32.mrb[0].mxu0
  %1020 = vdwg.mxu0
  %v1021 = vld [vmem:[%s4 + $0x2c] sm:$0xf]
  %v1022 = vld [vmem:[%s4 + $0x68] sm:$0xf]
  %v1023 = vld [vmem:[%s4 + $0xa4] sm:$0xf]
  %v1024 = vld [vmem:[%s4 + $0xe0] sm:$0xf]
  %v1029 = vunpack.c.l.b16 %v1021
  %v1030 = vunpack.c.l.b16 %v1022
  %v1031 = vunpack.c.l.b16 %v1023
  %v1032 = vunpack.c.l.b16 %v1024
  %v1033 = vpack.c.b16 %v1030, %v1029
  %v1034 = vpack.c.b16 %v1032, %v1031
  %1037 = vmatprep.subr.bf16.mxu0 0
  %1038 = vmatpush1.bf16.msra.mxu0 %v1033
  %1039 = vmatprep.subr.bf16.mxu0 0
  %1040 = vmatpush1.bf16.msra.mxu0 %v1034
  %1041 = vmatprep.subr.bf16.mxu0 0
  %1042 = vmatpush1.bf16.msra.mxu0 0
  %1043 = vmatprep.subr.bf16.mxu0 0
  %1044 = vmatpush1.bf16.msra.mxu0 0
  %1045 = vmatprep.subr.bf16.mxu0 0
  %1046 = vmatpush1.bf16.msra.mxu0 0
  %1047 = vmatprep.subr.bf16.mxu0 0
  %1048 = vmatpush1.bf16.msra.mxu0 0
  %1049 = vmatprep.subr.bf16.mxu0 0
  %1050 = vmatpush1.bf16.msra.mxu0 0
  %1051 = vmatprep.subr.bf16.mxu0 0
  %1052 = vmatpush1.bf16.msra.mxu0 0
  %1053 = vmatprep.subr.bf16.mxu0 0
  %1054 = vmatpush1.bf16.msra.mxu0 0
  %1055 = vmatprep.subr.bf16.mxu0 0
  %1056 = vmatpush1.bf16.msra.mxu0 0
  %1057 = vmatprep.subr.bf16.mxu0 0
  %1058 = vmatpush1.bf16.msra.mxu0 0
  %1059 = vmatprep.subr.bf16.mxu0 0
  %1060 = vmatpush1.bf16.msra.mxu0 0
  %1061 = vmatprep.subr.bf16.mxu0 0
  %1062 = vmatpush1.bf16.msra.mxu0 0
  %1063 = vmatprep.subr.bf16.mxu0 0
  %1064 = vmatpush1.bf16.msra.mxu0 0
  %1065 = vmatprep.subr.bf16.mxu0 0
  %1066 = vmatpush1.bf16.msra.mxu0 0
  %1067 = vmatprep.subr.bf16.mxu0 0
  %1068 = vmatpush1.bf16.msra.mxu0 0
  %1069 = vmatprep.mubr.bf16.mxu0 0
  %1070 = vmatmul.mubr.bf16.gmra.mrb[0].mxu0 %v978
  %v1071 = vpop.f32.mrb[0].mxu0
  %v1072 = vadd.f32 0.0, %v1071
  %v1073 = vpop.f32.mrb[0].mxu0
  %v1074 = vpop.f32.mrb[0].mxu0
  %v1075 = vadd.f32 0.0, %v1074
  %v1076 = vpop.f32.mrb[0].mxu0
  %1077 = vdwg.mxu0
  %v1078 = vpack.c.bf16 %v957, %v954
  %v1079 = vpack.c.bf16 %v1018, %v1015
  %v1081 = vsel %vm57, %v1078, 0
  %v1084 = vsel %vm57, %v1079, 0
  %1086 = vmatprep.subr.bf16.mxu0 0
  %1087 = vmatpush1.bf16.xpose.msra.mxu0 %v1084
  %1088 = vmatprep.subr.bf16.mxu0 0
  %1089 = vmatpush1.bf16.xpose.msra.mxu0 0
  %1090 = vmatprep.subr.bf16.mxu0 0
  %1091 = vmatpush1.bf16.xpose.msra.mxu0 0
  %1092 = vmatprep.subr.bf16.mxu0 0
  %1093 = vmatpush1.bf16.xpose.msra.mxu0 0
  %1094 = vmatprep.subr.bf16.mxu0 0
  %1095 = vmatpush1.bf16.xpose.msra.mxu0 0
  %1096 = vmatprep.subr.bf16.mxu0 0
  %1097 = vmatpush1.bf16.xpose.msra.mxu0 0
  %1098 = vmatprep.subr.bf16.mxu0 0
  %1099 = vmatpush1.bf16.xpose.msra.mxu0 0
  %1100 = vmatprep.subr.bf16.mxu0 0
  %1101 = vmatpush1.bf16.xpose.msra.mxu0 0
  %1102 = vmatprep.subr.bf16.mxu0 0
  %1103 = vmatpush1.bf16.xpose.msra.mxu0 0
  %1104 = vmatprep.subr.bf16.mxu0 0
  %1105 = vmatpush1.bf16.xpose.msra.mxu0 0
  %1106 = vmatprep.subr.bf16.mxu0 0
  %1107 = vmatpush1.bf16.xpose.msra.mxu0 0
  %1108 = vmatprep.subr.bf16.mxu0 0
  %1109 = vmatpush1.bf16.xpose.msra.mxu0 0
  %1110 = vmatprep.subr.bf16.mxu0 0
  %1111 = vmatpush1.bf16.xpose.msra.mxu0 0
  %1112 = vmatprep.subr.bf16.mxu0 0
  %1113 = vmatpush1.bf16.xpose.msra.mxu0 0
  %1114 = vmatprep.subr.bf16.mxu0 0
  %1115 = vmatpush1.bf16.xpose.msra.mxu0 0
  %1116 = vmatprep.subr.bf16.mxu0 0
  %1117 = vmatpush1.bf16.xpose.msra.mxu0 0
  %1118 = vmatprep.mubr.bf16.mxu0 0
  %1119 = vmatmul.mubr.bf16.gmra.mrb[0].mxu0 %v1081
  %v1120 = vpop.f32.mrb[0].mxu0
  %v1121 = vadd.f32 %v32, %v1120
  %v1122 = vpop.f32.mrb[0].mxu0
  %v1123 = vpop.f32.mrb[0].mxu0
  %v1124 = vadd.f32 %v33, %v1123
  %v1125 = vpop.f32.mrb[0].mxu0
  %1126 = vdwg.mxu0
  %v1127 = vsel %vm265, %v1121, -inf
  %1128 = vmax.xlane.f32.xlu0 %v1127
  %v1129 = vpop.xlane.xlu0 %1128
  %v1130 = vsel %vm265, %v1124, -inf
  %1131 = vmax.xlane.f32.xlu0 %v1130
  %v1132 = vpop.xlane.xlu0 %1131
  %v1133 = vsub.f32 %v1121, %v1129
  %v1134 = vsub.f32 %v1124, %v1132
  %v1135 = vmul.f32 %v1133, 1.442695
  %v1136 = vpow.pop %v1135
  %v1137 = vmul.f32 %v1134, 1.442695
  %v1138 = vpow.pop %v1137
  %v1139 = vsel %vm265, %v1136, 0.0
  %1140 = vadd.xlane.f32.xlu0 %v1139
  %v1141 = vpop.xlane.xlu0 %1140
  %v1142 = vsel %vm265, %v1138, 0.0
  %1143 = vadd.xlane.f32.xlu0 %v1142
  %v1144 = vpop.xlane.xlu0 %1143
  %v1145 = vrcp.pop %v1141
  %v1146 = vrcp.pop %v1144
  %v1147 = vmul.f32 %v1136, %v1145
  %v1148 = vmul.f32 %v1138, %v1146
  %v1149 = vpack.c.bf16 %v1148, %v1147
  %v1150 = vpack.c.bf16 %v1075, %v1072
  %v1152 = vsel %vm265, %v1149, 0
  %1154 = vmatprep.subr.bf16.mxu0 0
  %1155 = vmatpush1.bf16.msra.mxu0 %v1150
  %1156 = vmatprep.subr.bf16.mxu0 0
  %1157 = vmatpush1.bf16.msra.mxu0 0
  %1158 = vmatprep.subr.bf16.mxu0 0
  %1159 = vmatpush1.bf16.msra.mxu0 0
  %1160 = vmatprep.subr.bf16.mxu0 0
  %1161 = vmatpush1.bf16.msra.mxu0 0
  %1162 = vmatprep.subr.bf16.mxu0 0
  %1163 = vmatpush1.bf16.msra.mxu0 0
  %1164 = vmatprep.subr.bf16.mxu0 0
  %1165 = vmatpush1.bf16.msra.mxu0 0
  %1166 = vmatprep.subr.bf16.mxu0 0
  %1167 = vmatpush1.bf16.msra.mxu0 0
  %1168 = vmatprep.subr.bf16.mxu0 0
  %1169 = vmatpush1.bf16.msra.mxu0 0
  %1170 = vmatprep.subr.bf16.mxu0 0
  %1171 = vmatpush1.bf16.msra.mxu0 0
  %1172 = vmatprep.subr.bf16.mxu0 0
  %1173 = vmatpush1.bf16.msra.mxu0 0
  %1174 = vmatprep.subr.bf16.mxu0 0
  %1175 = vmatpush1.bf16.msra.mxu0 0
  %1176 = vmatprep.subr.bf16.mxu0 0
  %1177 = vmatpush1.bf16.msra.mxu0 0
  %1178 = vmatprep.subr.bf16.mxu0 0
  %1179 = vmatpush1.bf16.msra.mxu0 0
  %1180 = vmatprep.subr.bf16.mxu0 0
  %1181 = vmatpush1.bf16.msra.mxu0 0
  %1182 = vmatprep.subr.bf16.mxu0 0
  %1183 = vmatpush1.bf16.msra.mxu0 0
  %1184 = vmatprep.subr.bf16.mxu0 0
  %1185 = vmatpush1.bf16.msra.mxu0 0
  %1186 = vmatprep.mubr.bf16.mxu0 0
  %1187 = vmatmul.mubr.bf16.gmra.mrb[0].mxu0 %v1152
  %v1188 = vpop.f32.mrb[0].mxu0
  %v1189 = vadd.f32 0.0, %v1188
  %v1190 = vpop.f32.mrb[0].mxu0
  %v1191 = vpop.f32.mrb[0].mxu0
  %v1192 = vadd.f32 0.0, %v1191
  %v1193 = vpop.f32.mrb[0].mxu0
  %1194 = vdwg.mxu0
  %v1195 = vld [vmem:[%s4 + $0x30] sm:$0xf]
  %v1196 = vld [vmem:[%s4 + $0x6c] sm:$0xf]
  %v1197 = vld [vmem:[%s4 + $0xa8] sm:$0xf]
  %v1198 = vld [vmem:[%s4 + $0xe4] sm:$0xf]
  %v1199 = vpack.c.bf16 %v1192, %v1189
  %v1204 = vunpack.c.l.b16 %v1195
  %v1205 = vunpack.c.l.b16 %v1196
  %v1206 = vunpack.c.l.b16 %v1197
  %v1207 = vunpack.c.l.b16 %v1198
  %v1208 = vpack.c.b16 %v1205, %v1204
  %v1209 = vpack.c.b16 %v1207, %v1206
  %v1213 = vsel %vm57, %v1199, 0
  %1215 = vmatprep.subr.bf16.mxu0 0
  %1216 = vmatpush1.bf16.msra.mxu0 %v1208
  %1217 = vmatprep.subr.bf16.mxu0 0
  %1218 = vmatpush1.bf16.msra.mxu0 %v1209
  %1219 = vmatprep.subr.bf16.mxu0 0
  %1220 = vmatpush1.bf16.msra.mxu0 0
  %1221 = vmatprep.subr.bf16.mxu0 0
  %1222 = vmatpush1.bf16.msra.mxu0 0
  %1223 = vmatprep.subr.bf16.mxu0 0
  %1224 = vmatpush1.bf16.msra.mxu0 0
  %1225 = vmatprep.subr.bf16.mxu0 0
  %1226 = vmatpush1.bf16.msra.mxu0 0
  %1227 = vmatprep.subr.bf16.mxu0 0
  %1228 = vmatpush1.bf16.msra.mxu0 0
  %1229 = vmatprep.subr.bf16.mxu0 0
  %1230 = vmatpush1.bf16.msra.mxu0 0
  %1231 = vmatprep.subr.bf16.mxu0 0
  %1232 = vmatpush1.bf16.msra.mxu0 0
  %1233 = vmatprep.subr.bf16.mxu0 0
  %1234 = vmatpush1.bf16.msra.mxu0 0
  %1235 = vmatprep.subr.bf16.mxu0 0
  %1236 = vmatpush1.bf16.msra.mxu0 0
  %1237 = vmatprep.subr.bf16.mxu0 0
  %1238 = vmatpush1.bf16.msra.mxu0 0
  %1239 = vmatprep.subr.bf16.mxu0 0
  %1240 = vmatpush1.bf16.msra.mxu0 0
  %1241 = vmatprep.subr.bf16.mxu0 0
  %1242 = vmatpush1.bf16.msra.mxu0 0
  %1243 = vmatprep.subr.bf16.mxu0 0
  %1244 = vmatpush1.bf16.msra.mxu0 0
  %1245 = vmatprep.subr.bf16.mxu0 0
  %1246 = vmatpush1.bf16.msra.mxu0 0
  %1247 = vmatprep.mubr.bf16.mxu0 0
  %1248 = vmatmul.mubr.bf16.gmra.mrb[0].mxu0 %v1213
  %v1249 = vpop.f32.mrb[0].mxu0
  %v1250 = vadd.f32 0.0, %v1249
  %v1251 = vpop.f32.mrb[0].mxu0
  %v1252 = vpop.f32.mrb[0].mxu0
  %v1253 = vadd.f32 0.0, %v1252
  %v1254 = vpop.f32.mrb[0].mxu0
  %1255 = vdwg.mxu0
  %v1256 = vadd.f32 %v897, %v1250
  %v1257 = vadd.f32 %v898, %v1253
  %v1258 = vld [vmem:[%s4 + $0x34] sm:$0xf]
  %v1259 = vld [vmem:[%s4 + $0x70] sm:$0xf]
  %v1260 = vld [vmem:[%s4 + $0xac] sm:$0xf]
  %v1261 = vld [vmem:[%s4 + $0xe8] sm:$0xf]
  %v1262 = vpack.c.bf16 %v1257, %v1256
  %v1267 = vunpack.c.l.b16 %v1258
  %v1268 = vunpack.c.l.b16 %v1259
  %v1269 = vunpack.c.l.b16 %v1260
  %v1270 = vunpack.c.l.b16 %v1261
  %v1271 = vpack.c.b16 %v1268, %v1267
  %v1272 = vpack.c.b16 %v1270, %v1269
  %v1276 = vsel %vm57, %v1262, 0
  %1278 = vmatprep.subr.bf16.mxu0 0
  %1279 = vmatpush1.bf16.msra.mxu0 %v1271
  %1280 = vmatprep.subr.bf16.mxu0 0
  %1281 = vmatpush1.bf16.msra.mxu0 %v1272
  %1282 = vmatprep.subr.bf16.mxu0 0
  %1283 = vmatpush1.bf16.msra.mxu0 0
  %1284 = vmatprep.subr.bf16.mxu0 0
  %1285 = vmatpush1.bf16.msra.mxu0 0
  %1286 = vmatprep.subr.bf16.mxu0 0
  %1287 = vmatpush1.bf16.msra.mxu0 0
  %1288 = vmatprep.subr.bf16.mxu0 0
  %1289 = vmatpush1.bf16.msra.mxu0 0
  %1290 = vmatprep.subr.bf16.mxu0 0
  %1291 = vmatpush1.bf16.msra.mxu0 0
  %1292 = vmatprep.subr.bf16.mxu0 0
  %1293 = vmatpush1.bf16.msra.mxu0 0
  %1294 = vmatprep.subr.bf16.mxu0 0
  %1295 = vmatpush1.bf16.msra.mxu0 0
  %1296 = vmatprep.subr.bf16.mxu0 0
  %1297 = vmatpush1.bf16.msra.mxu0 0
  %1298 = vmatprep.subr.bf16.mxu0 0
  %1299 = vmatpush1.bf16.msra.mxu0 0
  %1300 = vmatprep.subr.bf16.mxu0 0
  %1301 = vmatpush1.bf16.msra.mxu0 0
  %1302 = vmatprep.subr.bf16.mxu0 0
  %1303 = vmatpush1.bf16.msra.mxu0 0
  %1304 = vmatprep.subr.bf16.mxu0 0
  %1305 = vmatpush1.bf16.msra.mxu0 0
  %1306 = vmatprep.subr.bf16.mxu0 0
  %1307 = vmatpush1.bf16.msra.mxu0 0
  %1308 = vmatprep.subr.bf16.mxu0 0
  %1309 = vmatpush1.bf16.msra.mxu0 0
  %1310 = vmatprep.mubr.bf16.mxu0 0
  %1311 = vmatmul.mubr.bf16.gmra.mrb[0].mxu0 %v1276
  %v1312 = vpop.f32.mrb[0].mxu0
  %v1313 = vadd.f32 0.0, %v1312
  %v1314 = vpop.f32.mrb[0].mxu0
  %v1315 = vpop.f32.mrb[0].mxu0
  %v1316 = vadd.f32 0.0, %v1315
  %v1317 = vpop.f32.mrb[0].mxu0
  %1318 = vdwg.mxu0
  %v1319 = vmax.f32 %v1313, 0.0
  %v1320 = vmax.f32 %v1316, 0.0
  %v1321 = vld [vmem:[%s5 + $0x4] sm:$0xf]
  %v1322 = vld [vmem:[%s5 + $0xc] sm:$0xf]
  %v1323 = vld [vmem:[%s5 + $0x14] sm:$0xf]
  %v1324 = vld [vmem:[%s5 + $0x1c] sm:$0xf]
  %v1325 = vld [vmem:[%s5 + $0x24] sm:$0xf]
  %v1326 = vld [vmem:[%s5 + $0x2c] sm:$0xf]
  %v1327 = vld [vmem:[%s5 + $0x34] sm:$0xf]
  %v1328 = vld [vmem:[%s5 + $0x3c] sm:$0xf]
  %v1329 = vpack.c.bf16 %v1320, %v1319
  %v1338 = vunpack.c.l.b16 %v1321
  %v1339 = vunpack.c.l.b16 %v1322
  %v1340 = vunpack.c.l.b16 %v1323
  %v1341 = vunpack.c.l.b16 %v1324
  %v1342 = vunpack.c.l.b16 %v1325
  %v1343 = vunpack.c.l.b16 %v1326
  %v1344 = vunpack.c.l.b16 %v1327
  %v1345 = vunpack.c.l.b16 %v1328
  %v1346 = vpack.c.b16 %v1339, %v1338
  %v1347 = vpack.c.b16 %v1341, %v1340
  %v1348 = vpack.c.b16 %v1343, %v1342
  %v1349 = vpack.c.b16 %v1345, %v1344
  %v1355 = vsel %vm493, %v1329, 0
  %1357 = vmatprep.subr.bf16.mxu0 0
  %1358 = vmatpush1.bf16.msra.mxu0 %v1346
  %1359 = vmatprep.subr.bf16.mxu0 0
  %1360 = vmatpush1.bf16.msra.mxu0 %v1347
  %1361 = vmatprep.subr.bf16.mxu0 0
  %1362 = vmatpush1.bf16.msra.mxu0 %v1348
  %1363 = vmatprep.subr.bf16.mxu0 0
  %1364 = vmatpush1.bf16.msra.mxu0 %v1349
  %1365 = vmatprep.subr.bf16.mxu0 0
  %1366 = vmatpush1.bf16.msra.mxu0 0
  %1367 = vmatprep.subr.bf16.mxu0 0
  %1368 = vmatpush1.bf16.msra.mxu0 0
  %1369 = vmatprep.subr.bf16.mxu0 0
  %1370 = vmatpush1.bf16.msra.mxu0 0
  %1371 = vmatprep.subr.bf16.mxu0 0
  %1372 = vmatpush1.bf16.msra.mxu0 0
  %1373 = vmatprep.subr.bf16.mxu0 0
  %1374 = vmatpush1.bf16.msra.mxu0 0
  %1375 = vmatprep.subr.bf16.mxu0 0
  %1376 = vmatpush1.bf16.msra.mxu0 0
  %1377 = vmatprep.subr.bf16.mxu0 0
  %1378 = vmatpush1.bf16.msra.mxu0 0
  %1379 = vmatprep.subr.bf16.mxu0 0
  %1380 = vmatpush1.bf16.msra.mxu0 0
  %1381 = vmatprep.subr.bf16.mxu0 0
  %1382 = vmatpush1.bf16.msra.mxu0 0
  %1383 = vmatprep.subr.bf16.mxu0 0
  %1384 = vmatpush1.bf16.msra.mxu0 0
  %1385 = vmatprep.subr.bf16.mxu0 0
  %1386 = vmatpush1.bf16.msra.mxu0 0
  %1387 = vmatprep.subr.bf16.mxu0 0
  %1388 = vmatpush1.bf16.msra.mxu0 0
  %1389 = vmatprep.mubr.bf16.mxu0 0
  %1390 = vmatmul.mubr.bf16.gmra.mrb[0].mxu0 %v1355
  %v1391 = vpop.f32.mrb[0].mxu0
  %v1392 = vadd.f32 0.0, %v1391
  %v1393 = vpop.f32.mrb[0].mxu0
  %v1394 = vpop.f32.mrb[0].mxu0
  %v1395 = vadd.f32 0.0, %v1394
  %v1396 = vpop.f32.mrb[0].mxu0
  %1397 = vdwg.mxu0
  %v1398 = vadd.f32 %v1256, %v1392
  %v1399 = vadd.f32 %v1257, %v1395
  %v1400 = vld [vmem:[%s4 + $0x38] sm:$0xf]
  %v1401 = vld [vmem:[%s4 + $0x74] sm:$0xf]
  %v1402 = vld [vmem:[%s4 + $0xb0] sm:$0xf]
  %v1403 = vld [vmem:[%s4 + $0xec] sm:$0xf]
  %v1404 = vpack.c.bf16 %v1399, %v1398
  %v1409 = vunpack.c.l.b16 %v1400
  %v1410 = vunpack.c.l.b16 %v1401
  %v1411 = vunpack.c.l.b16 %v1402
  %v1412 = vunpack.c.l.b16 %v1403
  %v1413 = vpack.c.b16 %v1410, %v1409
  %v1414 = vpack.c.b16 %v1412, %v1411
  %v1418 = vsel %vm57, %v1404, 0
  %1420 = vmatprep.subr.bf16.mxu0 0
  %1421 = vmatpush1.bf16.msra.mxu0 %v1413
  %1422 = vmatprep.subr.bf16.mxu0 0
  %1423 = vmatpush1.bf16.msra.mxu0 %v1414
  %1424 = vmatprep.subr.bf16.mxu0 0
  %1425 = vmatpush1.bf16.msra.mxu0 0
  %1426 = vmatprep.subr.bf16.mxu0 0
  %1427 = vmatpush1.bf16.msra.mxu0 0
  %1428 = vmatprep.subr.bf16.mxu0 0
  %1429 = vmatpush1.bf16.msra.mxu0 0
  %1430 = vmatprep.subr.bf16.mxu0 0
  %1431 = vmatpush1.bf16.msra.mxu0 0
  %1432 = vmatprep.subr.bf16.mxu0 0
  %1433 = vmatpush1.bf16.msra.mxu0 0
  %1434 = vmatprep.subr.bf16.mxu0 0
  %1435 = vmatpush1.bf16.msra.mxu0 0
  %1436 = vmatprep.subr.bf16.mxu0 0
  %1437 = vmatpush1.bf16.msra.mxu0 0
  %1438 = vmatprep.subr.bf16.mxu0 0
  %1439 = vmatpush1.bf16.msra.mxu0 0
  %1440 = vmatprep.subr.bf16.mxu0 0
  %1441 = vmatpush1.bf16.msra.mxu0 0
  %1442 = vmatprep.subr.bf16.mxu0 0
  %1443 = vmatpush1.bf16.msra.mxu0 0
  %1444 = vmatprep.subr.bf16.mxu0 0
  %1445 = vmatpush1.bf16.msra.mxu0 0
  %1446 = vmatprep.subr.bf16.mxu0 0
  %1447 = vmatpush1.bf16.msra.mxu0 0
  %1448 = vmatprep.subr.bf16.mxu0 0
  %1449 = vmatpush1.bf16.msra.mxu0 0
  %1450 = vmatprep.subr.bf16.mxu0 0
  %1451 = vmatpush1.bf16.msra.mxu0 0
  %1452 = vmatprep.mubr.bf16.mxu0 0
  %1453 = vmatmul.mubr.bf16.gmra.mrb[0].mxu0 %v1418
  %v1454 = vpop.f32.mrb[0].mxu0
  %v1455 = vadd.f32 0.0, %v1454
  %v1456 = vpop.f32.mrb[0].mxu0
  %v1457 = vpop.f32.mrb[0].mxu0
  %v1458 = vadd.f32 0.0, %v1457
  %v1459 = vpop.f32.mrb[0].mxu0
  %1460 = vdwg.mxu0
  %1461 = vst [vmem:[%s6] sm:$0xff] %v1455
  %1462 = vst [vmem:[%s6 + $0x8] sm:$0xff] %v1458
  // Predicated region
  $region26: #{ms2mol_wrapper_generator_forward.1} parent=0 // pred_check
    _
  $region27: #{ms2mol_wrapper_generator_forward.1} parent=0 // pred_check_branch
    %1464 = sbr.rel (0) target = $region29
  $region28: #{ms2mol_wrapper_generator_forward.1} parent=0 // pred_region
    _
  $region29: #{ms2mol_wrapper_generator_forward.1} parent=0 // pred_fallthru
    _
  // Predicated region
  $region30: #{ms2mol_wrapper_generator_forward.1} parent=0 // pred_check
    _
  $region31: #{ms2mol_wrapper_generator_forward.1} parent=0 // pred_check_branch
    %1466 = sbr.rel (0) target = $region33
  $region32: #{ms2mol_wrapper_generator_forward.1} parent=0 // pred_region
    _
  $region33: #{ms2mol_wrapper_generator_forward.1} parent=0 // pred_fallthru
    _

</llo_original>
